<compile_context>
chip_gen: v5e
topology: v5e:2x2
jax: 0.10.0
libtpu: 0.0.40
codegen_flags: <defaults>
</compile_context>

<pallas_src>
import functools

import numpy as np
import jax
import jax.numpy as jnp
from jax.experimental import pallas as pl
from jax.experimental.pallas import tpu as pltpu

NEG_SLOPE = 0.2  # LeakyReLU negative slope used throughout the module


# ------------------------- trace-time DFT matrices --------------------------

@functools.lru_cache(maxsize=None)
def _dft_mats_np(h, w):
    """Kron-DFT matrices for ortho 2-D rfft / irfft on row-major flattened (H*W)."""
    wf = w // 2 + 1
    # Forward:  Fr = D_H @ Y @ D_W   (norm='ortho')
    dh = np.exp(-2j * np.pi * np.outer(np.arange(h), np.arange(h)) / h) / np.sqrt(h)
    dw = np.exp(-2j * np.pi * np.outer(np.arange(w), np.arange(wf)) / w) / np.sqrt(w)
    # vec_r(A @ Y @ B) = vec_r(Y) @ kron(A.T, B)
    k = np.kron(dh.T, dw)                                   # (h*w, h*wf) complex

    # Inverse (matches numpy/torch irfftn): full c2c ifft along H, then c2r
    # irfft along W (imag parts of the DC / Nyquist W-bins are dropped, which
    # the sin terms below do automatically).
    eh = np.exp(2j * np.pi * np.outer(np.arange(h), np.arange(h)) / h) / np.sqrt(h)
    alpha = np.full((wf,), 2.0)
    alpha[0] = 1.0
    if w % 2 == 0:
        alpha[w // 2] = 1.0
    ang = 2.0 * np.pi * np.outer(np.arange(wf), np.arange(w)) / w
    gc = alpha[:, None] * np.cos(ang) / np.sqrt(w)          # (wf, w)
    gs = alpha[:, None] * np.sin(ang) / np.sqrt(w)          # (wf, w)
    # out = Re(E_H @ Z) @ gc - Im(E_H @ Z) @ gs, flattened row-major:
    kinv_r = np.kron(eh.real.T, gc) - np.kron(eh.imag.T, gs)    # (h*wf, h*w)
    kinv_i = -np.kron(eh.imag.T, gc) - np.kron(eh.real.T, gs)   # (h*wf, h*w)

    f32 = np.float32
    return (k.real.astype(f32), k.imag.astype(f32),
            kinv_r.astype(f32), kinv_i.astype(f32))


# ------------------------------ Pallas kernel --------------------------------

def _channel_mix(w, v):
    """Small (O, K) @ (K, N) channel mix.

    For tiny K (the 1x1-conv channel mixes) this is unrolled into broadcast
    multiply-adds on the VPU — the VALU slots are otherwise idle here — which
    keeps the MXU exclusively for the fat-K DFT matmuls.  Falls back to a
    regular MXU dot for larger K (big batch blocks).
    """
    k = w.shape[1]
    if k > 32:
        return jnp.dot(w, v, preferred_element_type=jnp.float32)
    acc = w[:, 0:1] * v[0:1, :]
    for i in range(1, k):
        acc = acc + w[:, i:i + 1] * v[i:i + 1, :]
    return acc


def _freq_transform_kernel(x_ref, w1_ref, kf_ref, wrr_ref, wri_ref,
                           wir_ref, wii_ref, kinv_ref, w2_ref, o_ref, *, mf):
    f32 = jnp.float32

    def lrelu(v):
        return jnp.where(v >= 0, v, NEG_SLOPE * v)

    x = x_ref[...]                                    # (Bblk*Cin, M)

    # conv1: 1x1 conv + LeakyReLU(0.2)  (VPU, block-diag weight over batch)
    y = lrelu(_channel_mix(w1_ref[...], x))           # (R, M), R = Bblk*Cmid

    # Forward 2-D rfft (ortho): ONE fat MXU dot against [K_re | K_im].
    f = jnp.dot(y, kf_ref[...], preferred_element_type=f32)   # (R, 2*Mf)
    fr_re = f[:, :mf]
    fr_im = f[:, mf:]

    # FourierUnit 1x1 conv on interleaved (re, im) channels, expressed on the
    # split real/imag planes with pre-sliced block-diag weights (VPU) + LReLU.
    z_re = lrelu(_channel_mix(wrr_ref[...], fr_re)
                 + _channel_mix(wri_ref[...], fr_im))          # (R, Mf)
    z_im = lrelu(_channel_mix(wir_ref[...], fr_re)
                 + _channel_mix(wii_ref[...], fr_im))          # (R, Mf)

    # Inverse 2-D irfft (ortho): ONE fat MXU dot of [z_re | z_im] @ [Kr; Ki].
    zc = jnp.concatenate([z_re, z_im], axis=1)                 # (R, 2*Mf)
    fu = jnp.dot(zc, kinv_ref[...], preferred_element_type=f32)  # (R, M)

    # conv2 of (y + fu): residual add fused, lane-dense (Bblk*Cout, M) store.
    o_ref[...] = _channel_mix(w2_ref[...], y + fu).astype(o_ref.dtype)


# -------------------------------- wrapper ------------------------------------

def _pick_batch_block(b, cmid):
    """Largest divisor of B whose folded row count (bblk*Cmid) targets ~128 rows."""
    target = max(1, 128 // max(cmid, 1))
    bblk = 1
    for d in range(1, b + 1):
        if b % d == 0 and d <= target:
            bblk = d
    return bblk


def frequency_transform(x, params, *, bblk=None):
    """x: (B, Cin, H, W) float32 -> (B, Cout, H, W) float32."""
    b, cin, h, w = x.shape
    w1 = params["w_conv1"]        # (Cmid, Cin)      PyTorch (out, in) layout
    w_fu = params["w_fu"]         # (2*Cmid, 2*Cmid) channels interleaved [re, im]
    w2 = params["w_conv2"]        # (Cout, Cmid)
    cmid = w1.shape[0]
    cout = w2.shape[0]
    m = h * w
    wf = w // 2 + 1
    mf = h * wf

    if bblk is None:
        bblk = _pick_batch_block(b, cmid)
    assert b % bblk == 0, (b, bblk)
    nblk = b // bblk
    r = bblk * cmid

    # Trace-time DFT constants, with the re/im pairs fused:
    #   forward:  [K_re | K_im]           (M, 2*Mf)
    #   inverse:  [Kinv_re ; Kinv_im]     (2*Mf, M)
    k_re_np, k_im_np, kinv_r_np, kinv_i_np = _dft_mats_np(h, w)
    kf = jnp.asarray(np.concatenate([k_re_np, k_im_np], axis=1))
    kinv = jnp.asarray(np.concatenate([kinv_r_np, kinv_i_np], axis=0))

    # Block-diagonal (over the batch block) channel-mix weights; kron is tiny
    # and traced once per call.  FourierUnit weight is split into its re/im
    # blocks (interleaving: channel 2c = real of c, 2c+1 = imag of c).
    eye = jnp.eye(bblk, dtype=jnp.float32)
    w1_bd = jnp.kron(eye, w1)                 # (R, Bblk*Cin)
    w2_bd = jnp.kron(eye, w2)                 # (Bblk*Cout, R)
    wrr_bd = jnp.kron(eye, w_fu[0::2, 0::2])  # (R, R)
    wri_bd = jnp.kron(eye, w_fu[0::2, 1::2])
    wir_bd = jnp.kron(eye, w_fu[1::2, 0::2])
    wii_bd = jnp.kron(eye, w_fu[1::2, 1::2])

    # Free reshape (contiguous trailing dims): NCHW -> (B*Cin, H*W), lane-dense
    # with batch folded onto the matmul row axis.
    x_rows = x.reshape(b * cin, m)

    def _const(shape):
        return pl.BlockSpec(shape, lambda i: (0,) * len(shape))

    kernel = functools.partial(_freq_transform_kernel, mf=mf)

    out_rows = pl.pallas_call(
        kernel,
        out_shape=jax.ShapeDtypeStruct((b * cout, m), jnp.float32),
        grid=(nblk,),
        in_specs=[
            pl.BlockSpec((bblk * cin, m), lambda i: (i, 0)),   # x (batch block)
            _const((r, bblk * cin)),                            # conv1 weight
            _const((m, 2 * mf)),                                # forward DFT
            _const((r, r)), _const((r, r)),                     # FU w_rr, w_ri
            _const((r, r)), _const((r, r)),                     # FU w_ir, w_ii
            _const((2 * mf, m)),                                # inverse DFT
            _const((bblk * cout, r)),                           # conv2 weight
        ],
        out_specs=pl.BlockSpec((bblk * cout, m), lambda i: (i, 0)),
        compiler_params=pltpu.CompilerParams(
            dimension_semantics=("parallel",),
            vmem_limit_bytes=32 * 1024 * 1024,
        ),
    )(x_rows, w1_bd, kf, wrr_bd, wri_bd, wir_bd, wii_bd, kinv, w2_bd)

    return out_rows.reshape(b, cout, h, w)


# ------------------------ pure-JAX reference (checking) ----------------------

def frequency_transform_ref(x, params):
    def lrelu(v):
        return jnp.where(v >= 0, v, NEG_SLOPE * v)

    def conv1x1(v, wmat):                       # wmat: (Cout, Cin), PyTorch layout
        return jnp.einsum("oi,bihw->bohw", wmat, v)

    y = lrelu(conv1x1(x, params["w_conv1"]))
    b, c, h, w = y.shape
    fr = jnp.fft.rfftn(y, axes=(-2, -1), norm="ortho")
    wf = fr.shape[-1]
    st = jnp.stack((jnp.real(fr), jnp.imag(fr)), axis=2).reshape(b, 2 * c, h, wf)
    cf = lrelu(conv1x1(st, params["w_fu"]))
    z = cf.reshape(b, c, 2, h, wf)
    comp = jax.lax.complex(z[:, :, 0], z[:, :, 1])
    fu = jnp.fft.irfftn(comp, s=(h, w), axes=(-2, -1), norm="ortho")
    return conv1x1(y + fu, params["w_conv2"])


# ------------------------------- parameters ----------------------------------

def init_params(key, in_channels, out_channels):
    cmid = out_channels // 2
    k1, k2, k3 = jax.random.split(key, 3)
    # PyTorch Conv2d weight layout (Cout, Cin) for 1x1 convs; all convs bias=False.
    return dict(
        w_conv1=jax.random.normal(k1, (cmid, in_channels), jnp.float32) * 0.1,
        w_fu=jax.random.normal(k2, (2 * cmid, 2 * cmid), jnp.float32) * 0.1,
        w_conv2=jax.random.normal(k3, (out_channels, cmid), jnp.float32) * 0.1,
    )


# ---------------------------------- main --------------------------------------

if __name__ == "__main__":
    key = jax.random.PRNGKey(0)
    kx, kp = jax.random.split(key)

    B, Cin, H, W = 2, 4, 16, 16
    Cout = 8

    x = jax.random.normal(kx, (B, Cin, H, W), jnp.float32)
    params = init_params(kp, Cin, Cout)

    out = jax.jit(frequency_transform)(x, params)
    out = jax.block_until_ready(out)
    assert out.shape == (B, Cout, H, W), out.shape
    assert out.dtype == jnp.float32

    ref = jax.block_until_ready(jax.jit(frequency_transform_ref)(x, params))
    err = float(jnp.max(jnp.abs(out - ref)))
    assert err < 1e-3, f"max abs error vs jnp.fft reference: {err}"

    print("KERNEL_OK")
</pallas_src>

<mosaic_0001>
module attributes {stable_mosaic.version = 11 : i64} {
  func.func @_freq_transform_kernel(%arg0: i32, %arg1: memref<8x256xf32, #tpu.memory_space<vmem>>, %arg2: memref<8x8xf32, #tpu.memory_space<vmem>>, %arg3: memref<256x288xf32, #tpu.memory_space<vmem>>, %arg4: memref<8x8xf32, #tpu.memory_space<vmem>>, %arg5: memref<8x8xf32, #tpu.memory_space<vmem>>, %arg6: memref<8x8xf32, #tpu.memory_space<vmem>>, %arg7: memref<8x8xf32, #tpu.memory_space<vmem>>, %arg8: memref<288x256xf32, #tpu.memory_space<vmem>>, %arg9: memref<16x8xf32, #tpu.memory_space<vmem>>, %arg10: memref<16x256xf32, #tpu.memory_space<vmem>>) attributes {dimension_semantics = [#tpu.dimension_semantics<parallel>], iteration_bounds = array<i64: 1>, scalar_prefetch = 0 : i64, scratch_operands = 0 : i64, tpu.core_type = #tpu.core_type<tc>, window_params = [{transform_indices = @transform_0, window_bounds = array<i64: 8, 256>}, {pipeline_mode = #tpu.pipeline_mode<synchronous>, transform_indices = @transform_1, window_bounds = array<i64: 8, 8>}, {pipeline_mode = #tpu.pipeline_mode<synchronous>, transform_indices = @transform_2, window_bounds = array<i64: 256, 288>}, {pipeline_mode = #tpu.pipeline_mode<synchronous>, transform_indices = @transform_3, window_bounds = array<i64: 8, 8>}, {pipeline_mode = #tpu.pipeline_mode<synchronous>, transform_indices = @transform_4, window_bounds = array<i64: 8, 8>}, {pipeline_mode = #tpu.pipeline_mode<synchronous>, transform_indices = @transform_5, window_bounds = array<i64: 8, 8>}, {pipeline_mode = #tpu.pipeline_mode<synchronous>, transform_indices = @transform_6, window_bounds = array<i64: 8, 8>}, {pipeline_mode = #tpu.pipeline_mode<synchronous>, transform_indices = @transform_7, window_bounds = array<i64: 288, 256>}, {pipeline_mode = #tpu.pipeline_mode<synchronous>, transform_indices = @transform_8, window_bounds = array<i64: 16, 8>}, {transform_indices = @transform_9, window_bounds = array<i64: 16, 256>}]} {
    %c0 = arith.constant 0 : index
    %c0_0 = arith.constant 0 : index
    %0 = vector.load %arg1[%c0, %c0_0] : memref<8x256xf32, #tpu.memory_space<vmem>>, vector<8x256xf32>
    %c0_1 = arith.constant 0 : index
    %c0_2 = arith.constant 0 : index
    %1 = vector.load %arg2[%c0_1, %c0_2] : memref<8x8xf32, #tpu.memory_space<vmem>>, vector<8x8xf32>
    %2 = vector.extract_strided_slice %1 {offsets = [0, 0], sizes = [8, 1], strides = [1, 1]} : vector<8x8xf32> to vector<8x1xf32>
    %3 = vector.extract_strided_slice %0 {offsets = [0, 0], sizes = [1, 256], strides = [1, 1]} : vector<8x256xf32> to vector<1x256xf32>
    %4 = vector.broadcast %2 : vector<8x1xf32> to vector<8x256xf32>
    %5 = vector.broadcast %3 : vector<1x256xf32> to vector<8x256xf32>
    %6 = arith.mulf %4, %5 : vector<8x256xf32>
    %7 = vector.extract_strided_slice %1 {offsets = [0, 1], sizes = [8, 1], strides = [1, 1]} : vector<8x8xf32> to vector<8x1xf32>
    %8 = vector.extract_strided_slice %0 {offsets = [1, 0], sizes = [1, 256], strides = [1, 1]} : vector<8x256xf32> to vector<1x256xf32>
    %9 = vector.broadcast %7 : vector<8x1xf32> to vector<8x256xf32>
    %10 = vector.broadcast %8 : vector<1x256xf32> to vector<8x256xf32>
    %11 = arith.mulf %9, %10 : vector<8x256xf32>
    %12 = arith.addf %6, %11 : vector<8x256xf32>
    %13 = vector.extract_strided_slice %1 {offsets = [0, 2], sizes = [8, 1], strides = [1, 1]} : vector<8x8xf32> to vector<8x1xf32>
    %14 = vector.extract_strided_slice %0 {offsets = [2, 0], sizes = [1, 256], strides = [1, 1]} : vector<8x256xf32> to vector<1x256xf32>
    %15 = vector.broadcast %13 : vector<8x1xf32> to vector<8x256xf32>
    %16 = vector.broadcast %14 : vector<1x256xf32> to vector<8x256xf32>
    %17 = arith.mulf %15, %16 : vector<8x256xf32>
    %18 = arith.addf %12, %17 : vector<8x256xf32>
    %19 = vector.extract_strided_slice %1 {offsets = [0, 3], sizes = [8, 1], strides = [1, 1]} : vector<8x8xf32> to vector<8x1xf32>
    %20 = vector.extract_strided_slice %0 {offsets = [3, 0], sizes = [1, 256], strides = [1, 1]} : vector<8x256xf32> to vector<1x256xf32>
    %21 = vector.broadcast %19 : vector<8x1xf32> to vector<8x256xf32>
    %22 = vector.broadcast %20 : vector<1x256xf32> to vector<8x256xf32>
    %23 = arith.mulf %21, %22 : vector<8x256xf32>
    %24 = arith.addf %18, %23 : vector<8x256xf32>
    %25 = vector.extract_strided_slice %1 {offsets = [0, 4], sizes = [8, 1], strides = [1, 1]} : vector<8x8xf32> to vector<8x1xf32>
    %26 = vector.extract_strided_slice %0 {offsets = [4, 0], sizes = [1, 256], strides = [1, 1]} : vector<8x256xf32> to vector<1x256xf32>
    %27 = vector.broadcast %25 : vector<8x1xf32> to vector<8x256xf32>
    %28 = vector.broadcast %26 : vector<1x256xf32> to vector<8x256xf32>
    %29 = arith.mulf %27, %28 : vector<8x256xf32>
    %30 = arith.addf %24, %29 : vector<8x256xf32>
    %31 = vector.extract_strided_slice %1 {offsets = [0, 5], sizes = [8, 1], strides = [1, 1]} : vector<8x8xf32> to vector<8x1xf32>
    %32 = vector.extract_strided_slice %0 {offsets = [5, 0], sizes = [1, 256], strides = [1, 1]} : vector<8x256xf32> to vector<1x256xf32>
    %33 = vector.broadcast %31 : vector<8x1xf32> to vector<8x256xf32>
    %34 = vector.broadcast %32 : vector<1x256xf32> to vector<8x256xf32>
    %35 = arith.mulf %33, %34 : vector<8x256xf32>
    %36 = arith.addf %30, %35 : vector<8x256xf32>
    %37 = vector.extract_strided_slice %1 {offsets = [0, 6], sizes = [8, 1], strides = [1, 1]} : vector<8x8xf32> to vector<8x1xf32>
    %38 = vector.extract_strided_slice %0 {offsets = [6, 0], sizes = [1, 256], strides = [1, 1]} : vector<8x256xf32> to vector<1x256xf32>
    %39 = vector.broadcast %37 : vector<8x1xf32> to vector<8x256xf32>
    %40 = vector.broadcast %38 : vector<1x256xf32> to vector<8x256xf32>
    %41 = arith.mulf %39, %40 : vector<8x256xf32>
    %42 = arith.addf %36, %41 : vector<8x256xf32>
    %43 = vector.extract_strided_slice %1 {offsets = [0, 7], sizes = [8, 1], strides = [1, 1]} : vector<8x8xf32> to vector<8x1xf32>
    %44 = vector.extract_strided_slice %0 {offsets = [7, 0], sizes = [1, 256], strides = [1, 1]} : vector<8x256xf32> to vector<1x256xf32>
    %45 = vector.broadcast %43 : vector<8x1xf32> to vector<8x256xf32>
    %46 = vector.broadcast %44 : vector<1x256xf32> to vector<8x256xf32>
    %47 = arith.mulf %45, %46 : vector<8x256xf32>
    %48 = arith.addf %42, %47 : vector<8x256xf32>
    %cst = arith.constant 0.000000e+00 : f32
    %49 = vector.broadcast %cst : f32 to vector<8x256xf32>
    %50 = arith.cmpf oge, %48, %49 : vector<8x256xf32>
    %cst_3 = arith.constant 2.000000e-01 : f32
    %51 = vector.broadcast %cst_3 : f32 to vector<8x256xf32>
    %52 = arith.mulf %51, %48 : vector<8x256xf32>
    %53 = arith.select %50, %48, %52 : vector<8x256xi1>, vector<8x256xf32>
    %c0_4 = arith.constant 0 : index
    %c0_5 = arith.constant 0 : index
    %54 = vector.load %arg3[%c0_4, %c0_5] : memref<256x288xf32, #tpu.memory_space<vmem>>, vector<256x288xf32>
    %cst_6 = arith.constant dense<0.000000e+00> : vector<8x288xf32>
    %55 = tpu.matmul %53, %54, %cst_6 {dimension_numbers = #tpu.dot_dimension_numbers<[1], [0], [0], [1], [0, 0, 1, 1], [], []>} : vector<8x256xf32>, vector<256x288xf32>, vector<8x288xf32> -> vector<8x288xf32>
    %56 = vector.extract_strided_slice %55 {offsets = [0, 0], sizes = [8, 144], strides = [1, 1]} : vector<8x288xf32> to vector<8x144xf32>
    %57 = vector.extract_strided_slice %55 {offsets = [0, 144], sizes = [8, 144], strides = [1, 1]} : vector<8x288xf32> to vector<8x144xf32>
    %c0_7 = arith.constant 0 : index
    %c0_8 = arith.constant 0 : index
    %58 = vector.load %arg4[%c0_7, %c0_8] : memref<8x8xf32, #tpu.memory_space<vmem>>, vector<8x8xf32>
    %59 = vector.extract_strided_slice %58 {offsets = [0, 0], sizes = [8, 1], strides = [1, 1]} : vector<8x8xf32> to vector<8x1xf32>
    %60 = vector.extract_strided_slice %56 {offsets = [0, 0], sizes = [1, 144], strides = [1, 1]} : vector<8x144xf32> to vector<1x144xf32>
    %61 = vector.broadcast %59 : vector<8x1xf32> to vector<8x144xf32>
    %62 = vector.broadcast %60 : vector<1x144xf32> to vector<8x144xf32>
    %63 = arith.mulf %61, %62 : vector<8x144xf32>
    %64 = vector.extract_strided_slice %58 {offsets = [0, 1], sizes = [8, 1], strides = [1, 1]} : vector<8x8xf32> to vector<8x1xf32>
    %65 = vector.extract_strided_slice %56 {offsets = [1, 0], sizes = [1, 144], strides = [1, 1]} : vector<8x144xf32> to vector<1x144xf32>
    %66 = vector.broadcast %64 : vector<8x1xf32> to vector<8x144xf32>
    %67 = vector.broadcast %65 : vector<1x144xf32> to vector<8x144xf32>
    %68 = arith.mulf %66, %67 : vector<8x144xf32>
    %69 = arith.addf %63, %68 : vector<8x144xf32>
    %70 = vector.extract_strided_slice %58 {offsets = [0, 2], sizes = [8, 1], strides = [1, 1]} : vector<8x8xf32> to vector<8x1xf32>
    %71 = vector.extract_strided_slice %56 {offsets = [2, 0], sizes = [1, 144], strides = [1, 1]} : vector<8x144xf32> to vector<1x144xf32>
    %72 = vector.broadcast %70 : vector<8x1xf32> to vector<8x144xf32>
    %73 = vector.broadcast %71 : vector<1x144xf32> to vector<8x144xf32>
    %74 = arith.mulf %72, %73 : vector<8x144xf32>
    %75 = arith.addf %69, %74 : vector<8x144xf32>
    %76 = vector.extract_strided_slice %58 {offsets = [0, 3], sizes = [8, 1], strides = [1, 1]} : vector<8x8xf32> to vector<8x1xf32>
    %77 = vector.extract_strided_slice %56 {offsets = [3, 0], sizes = [1, 144], strides = [1, 1]} : vector<8x144xf32> to vector<1x144xf32>
    %78 = vector.broadcast %76 : vector<8x1xf32> to vector<8x144xf32>
    %79 = vector.broadcast %77 : vector<1x144xf32> to vector<8x144xf32>
    %80 = arith.mulf %78, %79 : vector<8x144xf32>
    %81 = arith.addf %75, %80 : vector<8x144xf32>
    %82 = vector.extract_strided_slice %58 {offsets = [0, 4], sizes = [8, 1], strides = [1, 1]} : vector<8x8xf32> to vector<8x1xf32>
    %83 = vector.extract_strided_slice %56 {offsets = [4, 0], sizes = [1, 144], strides = [1, 1]} : vector<8x144xf32> to vector<1x144xf32>
    %84 = vector.broadcast %82 : vector<8x1xf32> to vector<8x144xf32>
    %85 = vector.broadcast %83 : vector<1x144xf32> to vector<8x144xf32>
    %86 = arith.mulf %84, %85 : vector<8x144xf32>
    %87 = arith.addf %81, %86 : vector<8x144xf32>
    %88 = vector.extract_strided_slice %58 {offsets = [0, 5], sizes = [8, 1], strides = [1, 1]} : vector<8x8xf32> to vector<8x1xf32>
    %89 = vector.extract_strided_slice %56 {offsets = [5, 0], sizes = [1, 144], strides = [1, 1]} : vector<8x144xf32> to vector<1x144xf32>
    %90 = vector.broadcast %88 : vector<8x1xf32> to vector<8x144xf32>
    %91 = vector.broadcast %89 : vector<1x144xf32> to vector<8x144xf32>
    %92 = arith.mulf %90, %91 : vector<8x144xf32>
    %93 = arith.addf %87, %92 : vector<8x144xf32>
    %94 = vector.extract_strided_slice %58 {offsets = [0, 6], sizes = [8, 1], strides = [1, 1]} : vector<8x8xf32> to vector<8x1xf32>
    %95 = vector.extract_strided_slice %56 {offsets = [6, 0], sizes = [1, 144], strides = [1, 1]} : vector<8x144xf32> to vector<1x144xf32>
    %96 = vector.broadcast %94 : vector<8x1xf32> to vector<8x144xf32>
    %97 = vector.broadcast %95 : vector<1x144xf32> to vector<8x144xf32>
    %98 = arith.mulf %96, %97 : vector<8x144xf32>
    %99 = arith.addf %93, %98 : vector<8x144xf32>
    %100 = vector.extract_strided_slice %58 {offsets = [0, 7], sizes = [8, 1], strides = [1, 1]} : vector<8x8xf32> to vector<8x1xf32>
    %101 = vector.extract_strided_slice %56 {offsets = [7, 0], sizes = [1, 144], strides = [1, 1]} : vector<8x144xf32> to vector<1x144xf32>
    %102 = vector.broadcast %100 : vector<8x1xf32> to vector<8x144xf32>
    %103 = vector.broadcast %101 : vector<1x144xf32> to vector<8x144xf32>
    %104 = arith.mulf %102, %103 : vector<8x144xf32>
    %105 = arith.addf %99, %104 : vector<8x144xf32>
    %c0_9 = arith.constant 0 : index
    %c0_10 = arith.constant 0 : index
    %106 = vector.load %arg5[%c0_9, %c0_10] : memref<8x8xf32, #tpu.memory_space<vmem>>, vector<8x8xf32>
    %107 = vector.extract_strided_slice %106 {offsets = [0, 0], sizes = [8, 1], strides = [1, 1]} : vector<8x8xf32> to vector<8x1xf32>
    %108 = vector.extract_strided_slice %57 {offsets = [0, 0], sizes = [1, 144], strides = [1, 1]} : vector<8x144xf32> to vector<1x144xf32>
    %109 = vector.broadcast %107 : vector<8x1xf32> to vector<8x144xf32>
    %110 = vector.broadcast %108 : vector<1x144xf32> to vector<8x144xf32>
    %111 = arith.mulf %109, %110 : vector<8x144xf32>
    %112 = vector.extract_strided_slice %106 {offsets = [0, 1], sizes = [8, 1], strides = [1, 1]} : vector<8x8xf32> to vector<8x1xf32>
    %113 = vector.extract_strided_slice %57 {offsets = [1, 0], sizes = [1, 144], strides = [1, 1]} : vector<8x144xf32> to vector<1x144xf32>
    %114 = vector.broadcast %112 : vector<8x1xf32> to vector<8x144xf32>
    %115 = vector.broadcast %113 : vector<1x144xf32> to vector<8x144xf32>
    %116 = arith.mulf %114, %115 : vector<8x144xf32>
    %117 = arith.addf %111, %116 : vector<8x144xf32>
    %118 = vector.extract_strided_slice %106 {offsets = [0, 2], sizes = [8, 1], strides = [1, 1]} : vector<8x8xf32> to vector<8x1xf32>
    %119 = vector.extract_strided_slice %57 {offsets = [2, 0], sizes = [1, 144], strides = [1, 1]} : vector<8x144xf32> to vector<1x144xf32>
    %120 = vector.broadcast %118 : vector<8x1xf32> to vector<8x144xf32>
    %121 = vector.broadcast %119 : vector<1x144xf32> to vector<8x144xf32>
    %122 = arith.mulf %120, %121 : vector<8x144xf32>
    %123 = arith.addf %117, %122 : vector<8x144xf32>
    %124 = vector.extract_strided_slice %106 {offsets = [0, 3], sizes = [8, 1], strides = [1, 1]} : vector<8x8xf32> to vector<8x1xf32>
    %125 = vector.extract_strided_slice %57 {offsets = [3, 0], sizes = [1, 144], strides = [1, 1]} : vector<8x144xf32> to vector<1x144xf32>
    %126 = vector.broadcast %124 : vector<8x1xf32> to vector<8x144xf32>
    %127 = vector.broadcast %125 : vector<1x144xf32> to vector<8x144xf32>
    %128 = arith.mulf %126, %127 : vector<8x144xf32>
    %129 = arith.addf %123, %128 : vector<8x144xf32>
    %130 = vector.extract_strided_slice %106 {offsets = [0, 4], sizes = [8, 1], strides = [1, 1]} : vector<8x8xf32> to vector<8x1xf32>
    %131 = vector.extract_strided_slice %57 {offsets = [4, 0], sizes = [1, 144], strides = [1, 1]} : vector<8x144xf32> to vector<1x144xf32>
    %132 = vector.broadcast %130 : vector<8x1xf32> to vector<8x144xf32>
    %133 = vector.broadcast %131 : vector<1x144xf32> to vector<8x144xf32>
    %134 = arith.mulf %132, %133 : vector<8x144xf32>
    %135 = arith.addf %129, %134 : vector<8x144xf32>
    %136 = vector.extract_strided_slice %106 {offsets = [0, 5], sizes = [8, 1], strides = [1, 1]} : vector<8x8xf32> to vector<8x1xf32>
    %137 = vector.extract_strided_slice %57 {offsets = [5, 0], sizes = [1, 144], strides = [1, 1]} : vector<8x144xf32> to vector<1x144xf32>
    %138 = vector.broadcast %136 : vector<8x1xf32> to vector<8x144xf32>
    %139 = vector.broadcast %137 : vector<1x144xf32> to vector<8x144xf32>
    %140 = arith.mulf %138, %139 : vector<8x144xf32>
    %141 = arith.addf %135, %140 : vector<8x144xf32>
    %142 = vector.extract_strided_slice %106 {offsets = [0, 6], sizes = [8, 1], strides = [1, 1]} : vector<8x8xf32> to vector<8x1xf32>
    %143 = vector.extract_strided_slice %57 {offsets = [6, 0], sizes = [1, 144], strides = [1, 1]} : vector<8x144xf32> to vector<1x144xf32>
    %144 = vector.broadcast %142 : vector<8x1xf32> to vector<8x144xf32>
    %145 = vector.broadcast %143 : vector<1x144xf32> to vector<8x144xf32>
    %146 = arith.mulf %144, %145 : vector<8x144xf32>
    %147 = arith.addf %141, %146 : vector<8x144xf32>
    %148 = vector.extract_strided_slice %106 {offsets = [0, 7], sizes = [8, 1], strides = [1, 1]} : vector<8x8xf32> to vector<8x1xf32>
    %149 = vector.extract_strided_slice %57 {offsets = [7, 0], sizes = [1, 144], strides = [1, 1]} : vector<8x144xf32> to vector<1x144xf32>
    %150 = vector.broadcast %148 : vector<8x1xf32> to vector<8x144xf32>
    %151 = vector.broadcast %149 : vector<1x144xf32> to vector<8x144xf32>
    %152 = arith.mulf %150, %151 : vector<8x144xf32>
    %153 = arith.addf %147, %152 : vector<8x144xf32>
    %154 = arith.addf %105, %153 : vector<8x144xf32>
    %cst_11 = arith.constant 0.000000e+00 : f32
    %155 = vector.broadcast %cst_11 : f32 to vector<8x144xf32>
    %156 = arith.cmpf oge, %154, %155 : vector<8x144xf32>
    %cst_12 = arith.constant 2.000000e-01 : f32
    %157 = vector.broadcast %cst_12 : f32 to vector<8x144xf32>
    %158 = arith.mulf %157, %154 : vector<8x144xf32>
    %159 = arith.select %156, %154, %158 : vector<8x144xi1>, vector<8x144xf32>
    %c0_13 = arith.constant 0 : index
    %c0_14 = arith.constant 0 : index
    %160 = vector.load %arg6[%c0_13, %c0_14] : memref<8x8xf32, #tpu.memory_space<vmem>>, vector<8x8xf32>
    %161 = vector.extract_strided_slice %160 {offsets = [0, 0], sizes = [8, 1], strides = [1, 1]} : vector<8x8xf32> to vector<8x1xf32>
    %162 = vector.extract_strided_slice %56 {offsets = [0, 0], sizes = [1, 144], strides = [1, 1]} : vector<8x144xf32> to vector<1x144xf32>
    %163 = vector.broadcast %161 : vector<8x1xf32> to vector<8x144xf32>
    %164 = vector.broadcast %162 : vector<1x144xf32> to vector<8x144xf32>
    %165 = arith.mulf %163, %164 : vector<8x144xf32>
    %166 = vector.extract_strided_slice %160 {offsets = [0, 1], sizes = [8, 1], strides = [1, 1]} : vector<8x8xf32> to vector<8x1xf32>
    %167 = vector.extract_strided_slice %56 {offsets = [1, 0], sizes = [1, 144], strides = [1, 1]} : vector<8x144xf32> to vector<1x144xf32>
    %168 = vector.broadcast %166 : vector<8x1xf32> to vector<8x144xf32>
    %169 = vector.broadcast %167 : vector<1x144xf32> to vector<8x144xf32>
    %170 = arith.mulf %168, %169 : vector<8x144xf32>
    %171 = arith.addf %165, %170 : vector<8x144xf32>
    %172 = vector.extract_strided_slice %160 {offsets = [0, 2], sizes = [8, 1], strides = [1, 1]} : vector<8x8xf32> to vector<8x1xf32>
    %173 = vector.extract_strided_slice %56 {offsets = [2, 0], sizes = [1, 144], strides = [1, 1]} : vector<8x144xf32> to vector<1x144xf32>
    %174 = vector.broadcast %172 : vector<8x1xf32> to vector<8x144xf32>
    %175 = vector.broadcast %173 : vector<1x144xf32> to vector<8x144xf32>
    %176 = arith.mulf %174, %175 : vector<8x144xf32>
    %177 = arith.addf %171, %176 : vector<8x144xf32>
    %178 = vector.extract_strided_slice %160 {offsets = [0, 3], sizes = [8, 1], strides = [1, 1]} : vector<8x8xf32> to vector<8x1xf32>
    %179 = vector.extract_strided_slice %56 {offsets = [3, 0], sizes = [1, 144], strides = [1, 1]} : vector<8x144xf32> to vector<1x144xf32>
    %180 = vector.broadcast %178 : vector<8x1xf32> to vector<8x144xf32>
    %181 = vector.broadcast %179 : vector<1x144xf32> to vector<8x144xf32>
    %182 = arith.mulf %180, %181 : vector<8x144xf32>
    %183 = arith.addf %177, %182 : vector<8x144xf32>
    %184 = vector.extract_strided_slice %160 {offsets = [0, 4], sizes = [8, 1], strides = [1, 1]} : vector<8x8xf32> to vector<8x1xf32>
    %185 = vector.extract_strided_slice %56 {offsets = [4, 0], sizes = [1, 144], strides = [1, 1]} : vector<8x144xf32> to vector<1x144xf32>
    %186 = vector.broadcast %184 : vector<8x1xf32> to vector<8x144xf32>
    %187 = vector.broadcast %185 : vector<1x144xf32> to vector<8x144xf32>
    %188 = arith.mulf %186, %187 : vector<8x144xf32>
    %189 = arith.addf %183, %188 : vector<8x144xf32>
    %190 = vector.extract_strided_slice %160 {offsets = [0, 5], sizes = [8, 1], strides = [1, 1]} : vector<8x8xf32> to vector<8x1xf32>
    %191 = vector.extract_strided_slice %56 {offsets = [5, 0], sizes = [1, 144], strides = [1, 1]} : vector<8x144xf32> to vector<1x144xf32>
    %192 = vector.broadcast %190 : vector<8x1xf32> to vector<8x144xf32>
    %193 = vector.broadcast %191 : vector<1x144xf32> to vector<8x144xf32>
    %194 = arith.mulf %192, %193 : vector<8x144xf32>
    %195 = arith.addf %189, %194 : vector<8x144xf32>
    %196 = vector.extract_strided_slice %160 {offsets = [0, 6], sizes = [8, 1], strides = [1, 1]} : vector<8x8xf32> to vector<8x1xf32>
    %197 = vector.extract_strided_slice %56 {offsets = [6, 0], sizes = [1, 144], strides = [1, 1]} : vector<8x144xf32> to vector<1x144xf32>
    %198 = vector.broadcast %196 : vector<8x1xf32> to vector<8x144xf32>
    %199 = vector.broadcast %197 : vector<1x144xf32> to vector<8x144xf32>
    %200 = arith.mulf %198, %199 : vector<8x144xf32>
    %201 = arith.addf %195, %200 : vector<8x144xf32>
    %202 = vector.extract_strided_slice %160 {offsets = [0, 7], sizes = [8, 1], strides = [1, 1]} : vector<8x8xf32> to vector<8x1xf32>
    %203 = vector.extract_strided_slice %56 {offsets = [7, 0], sizes = [1, 144], strides = [1, 1]} : vector<8x144xf32> to vector<1x144xf32>
    %204 = vector.broadcast %202 : vector<8x1xf32> to vector<8x144xf32>
    %205 = vector.broadcast %203 : vector<1x144xf32> to vector<8x144xf32>
    %206 = arith.mulf %204, %205 : vector<8x144xf32>
    %207 = arith.addf %201, %206 : vector<8x144xf32>
    %c0_15 = arith.constant 0 : index
    %c0_16 = arith.constant 0 : index
    %208 = vector.load %arg7[%c0_15, %c0_16] : memref<8x8xf32, #tpu.memory_space<vmem>>, vector<8x8xf32>
    %209 = vector.extract_strided_slice %208 {offsets = [0, 0], sizes = [8, 1], strides = [1, 1]} : vector<8x8xf32> to vector<8x1xf32>
    %210 = vector.extract_strided_slice %57 {offsets = [0, 0], sizes = [1, 144], strides = [1, 1]} : vector<8x144xf32> to vector<1x144xf32>
    %211 = vector.broadcast %209 : vector<8x1xf32> to vector<8x144xf32>
    %212 = vector.broadcast %210 : vector<1x144xf32> to vector<8x144xf32>
    %213 = arith.mulf %211, %212 : vector<8x144xf32>
    %214 = vector.extract_strided_slice %208 {offsets = [0, 1], sizes = [8, 1], strides = [1, 1]} : vector<8x8xf32> to vector<8x1xf32>
    %215 = vector.extract_strided_slice %57 {offsets = [1, 0], sizes = [1, 144], strides = [1, 1]} : vector<8x144xf32> to vector<1x144xf32>
    %216 = vector.broadcast %214 : vector<8x1xf32> to vector<8x144xf32>
    %217 = vector.broadcast %215 : vector<1x144xf32> to vector<8x144xf32>
    %218 = arith.mulf %216, %217 : vector<8x144xf32>
    %219 = arith.addf %213, %218 : vector<8x144xf32>
    %220 = vector.extract_strided_slice %208 {offsets = [0, 2], sizes = [8, 1], strides = [1, 1]} : vector<8x8xf32> to vector<8x1xf32>
    %221 = vector.extract_strided_slice %57 {offsets = [2, 0], sizes = [1, 144], strides = [1, 1]} : vector<8x144xf32> to vector<1x144xf32>
    %222 = vector.broadcast %220 : vector<8x1xf32> to vector<8x144xf32>
    %223 = vector.broadcast %221 : vector<1x144xf32> to vector<8x144xf32>
    %224 = arith.mulf %222, %223 : vector<8x144xf32>
    %225 = arith.addf %219, %224 : vector<8x144xf32>
    %226 = vector.extract_strided_slice %208 {offsets = [0, 3], sizes = [8, 1], strides = [1, 1]} : vector<8x8xf32> to vector<8x1xf32>
    %227 = vector.extract_strided_slice %57 {offsets = [3, 0], sizes = [1, 144], strides = [1, 1]} : vector<8x144xf32> to vector<1x144xf32>
    %228 = vector.broadcast %226 : vector<8x1xf32> to vector<8x144xf32>
    %229 = vector.broadcast %227 : vector<1x144xf32> to vector<8x144xf32>
    %230 = arith.mulf %228, %229 : vector<8x144xf32>
    %231 = arith.addf %225, %230 : vector<8x144xf32>
    %232 = vector.extract_strided_slice %208 {offsets = [0, 4], sizes = [8, 1], strides = [1, 1]} : vector<8x8xf32> to vector<8x1xf32>
    %233 = vector.extract_strided_slice %57 {offsets = [4, 0], sizes = [1, 144], strides = [1, 1]} : vector<8x144xf32> to vector<1x144xf32>
    %234 = vector.broadcast %232 : vector<8x1xf32> to vector<8x144xf32>
    %235 = vector.broadcast %233 : vector<1x144xf32> to vector<8x144xf32>
    %236 = arith.mulf %234, %235 : vector<8x144xf32>
    %237 = arith.addf %231, %236 : vector<8x144xf32>
    %238 = vector.extract_strided_slice %208 {offsets = [0, 5], sizes = [8, 1], strides = [1, 1]} : vector<8x8xf32> to vector<8x1xf32>
    %239 = vector.extract_strided_slice %57 {offsets = [5, 0], sizes = [1, 144], strides = [1, 1]} : vector<8x144xf32> to vector<1x144xf32>
    %240 = vector.broadcast %238 : vector<8x1xf32> to vector<8x144xf32>
    %241 = vector.broadcast %239 : vector<1x144xf32> to vector<8x144xf32>
    %242 = arith.mulf %240, %241 : vector<8x144xf32>
    %243 = arith.addf %237, %242 : vector<8x144xf32>
    %244 = vector.extract_strided_slice %208 {offsets = [0, 6], sizes = [8, 1], strides = [1, 1]} : vector<8x8xf32> to vector<8x1xf32>
    %245 = vector.extract_strided_slice %57 {offsets = [6, 0], sizes = [1, 144], strides = [1, 1]} : vector<8x144xf32> to vector<1x144xf32>
    %246 = vector.broadcast %244 : vector<8x1xf32> to vector<8x144xf32>
    %247 = vector.broadcast %245 : vector<1x144xf32> to vector<8x144xf32>
    %248 = arith.mulf %246, %247 : vector<8x144xf32>
    %249 = arith.addf %243, %248 : vector<8x144xf32>
    %250 = vector.extract_strided_slice %208 {offsets = [0, 7], sizes = [8, 1], strides = [1, 1]} : vector<8x8xf32> to vector<8x1xf32>
    %251 = vector.extract_strided_slice %57 {offsets = [7, 0], sizes = [1, 144], strides = [1, 1]} : vector<8x144xf32> to vector<1x144xf32>
    %252 = vector.broadcast %250 : vector<8x1xf32> to vector<8x144xf32>
    %253 = vector.broadcast %251 : vector<1x144xf32> to vector<8x144xf32>
    %254 = arith.mulf %252, %253 : vector<8x144xf32>
    %255 = arith.addf %249, %254 : vector<8x144xf32>
    %256 = arith.addf %207, %255 : vector<8x144xf32>
    %cst_17 = arith.constant 0.000000e+00 : f32
    %257 = vector.broadcast %cst_17 : f32 to vector<8x144xf32>
    %258 = arith.cmpf oge, %256, %257 : vector<8x144xf32>
    %cst_18 = arith.constant 2.000000e-01 : f32
    %259 = vector.broadcast %cst_18 : f32 to vector<8x144xf32>
    %260 = arith.mulf %259, %256 : vector<8x144xf32>
    %261 = arith.select %258, %256, %260 : vector<8x144xi1>, vector<8x144xf32>
    %262 = tpu.concatenate %159, %261 in 1 : vector<8x144xf32>, vector<8x144xf32> -> vector<8x288xf32>
    %c0_19 = arith.constant 0 : index
    %c0_20 = arith.constant 0 : index
    %263 = vector.load %arg8[%c0_19, %c0_20] : memref<288x256xf32, #tpu.memory_space<vmem>>, vector<288x256xf32>
    %cst_21 = arith.constant dense<0.000000e+00> : vector<8x256xf32>
    %264 = tpu.matmul %262, %263, %cst_21 {dimension_numbers = #tpu.dot_dimension_numbers<[1], [0], [0], [1], [0, 0, 1, 1], [], []>} : vector<8x288xf32>, vector<288x256xf32>, vector<8x256xf32> -> vector<8x256xf32>
    %c0_22 = arith.constant 0 : index
    %c0_23 = arith.constant 0 : index
    %265 = vector.load %arg9[%c0_22, %c0_23] : memref<16x8xf32, #tpu.memory_space<vmem>>, vector<16x8xf32>
    %266 = arith.addf %53, %264 : vector<8x256xf32>
    %267 = vector.extract_strided_slice %265 {offsets = [0, 0], sizes = [16, 1], strides = [1, 1]} : vector<16x8xf32> to vector<16x1xf32>
    %268 = vector.extract_strided_slice %266 {offsets = [0, 0], sizes = [1, 256], strides = [1, 1]} : vector<8x256xf32> to vector<1x256xf32>
    %269 = vector.broadcast %267 : vector<16x1xf32> to vector<16x256xf32>
    %270 = vector.broadcast %268 : vector<1x256xf32> to vector<16x256xf32>
    %271 = arith.mulf %269, %270 : vector<16x256xf32>
    %272 = vector.extract_strided_slice %265 {offsets = [0, 1], sizes = [16, 1], strides = [1, 1]} : vector<16x8xf32> to vector<16x1xf32>
    %273 = vector.extract_strided_slice %266 {offsets = [1, 0], sizes = [1, 256], strides = [1, 1]} : vector<8x256xf32> to vector<1x256xf32>
    %274 = vector.broadcast %272 : vector<16x1xf32> to vector<16x256xf32>
    %275 = vector.broadcast %273 : vector<1x256xf32> to vector<16x256xf32>
    %276 = arith.mulf %274, %275 : vector<16x256xf32>
    %277 = arith.addf %271, %276 : vector<16x256xf32>
    %278 = vector.extract_strided_slice %265 {offsets = [0, 2], sizes = [16, 1], strides = [1, 1]} : vector<16x8xf32> to vector<16x1xf32>
    %279 = vector.extract_strided_slice %266 {offsets = [2, 0], sizes = [1, 256], strides = [1, 1]} : vector<8x256xf32> to vector<1x256xf32>
    %280 = vector.broadcast %278 : vector<16x1xf32> to vector<16x256xf32>
    %281 = vector.broadcast %279 : vector<1x256xf32> to vector<16x256xf32>
    %282 = arith.mulf %280, %281 : vector<16x256xf32>
    %283 = arith.addf %277, %282 : vector<16x256xf32>
    %284 = vector.extract_strided_slice %265 {offsets = [0, 3], sizes = [16, 1], strides = [1, 1]} : vector<16x8xf32> to vector<16x1xf32>
    %285 = vector.extract_strided_slice %266 {offsets = [3, 0], sizes = [1, 256], strides = [1, 1]} : vector<8x256xf32> to vector<1x256xf32>
    %286 = vector.broadcast %284 : vector<16x1xf32> to vector<16x256xf32>
    %287 = vector.broadcast %285 : vector<1x256xf32> to vector<16x256xf32>
    %288 = arith.mulf %286, %287 : vector<16x256xf32>
    %289 = arith.addf %283, %288 : vector<16x256xf32>
    %290 = vector.extract_strided_slice %265 {offsets = [0, 4], sizes = [16, 1], strides = [1, 1]} : vector<16x8xf32> to vector<16x1xf32>
    %291 = vector.extract_strided_slice %266 {offsets = [4, 0], sizes = [1, 256], strides = [1, 1]} : vector<8x256xf32> to vector<1x256xf32>
    %292 = vector.broadcast %290 : vector<16x1xf32> to vector<16x256xf32>
    %293 = vector.broadcast %291 : vector<1x256xf32> to vector<16x256xf32>
    %294 = arith.mulf %292, %293 : vector<16x256xf32>
    %295 = arith.addf %289, %294 : vector<16x256xf32>
    %296 = vector.extract_strided_slice %265 {offsets = [0, 5], sizes = [16, 1], strides = [1, 1]} : vector<16x8xf32> to vector<16x1xf32>
    %297 = vector.extract_strided_slice %266 {offsets = [5, 0], sizes = [1, 256], strides = [1, 1]} : vector<8x256xf32> to vector<1x256xf32>
    %298 = vector.broadcast %296 : vector<16x1xf32> to vector<16x256xf32>
    %299 = vector.broadcast %297 : vector<1x256xf32> to vector<16x256xf32>
    %300 = arith.mulf %298, %299 : vector<16x256xf32>
    %301 = arith.addf %295, %300 : vector<16x256xf32>
    %302 = vector.extract_strided_slice %265 {offsets = [0, 6], sizes = [16, 1], strides = [1, 1]} : vector<16x8xf32> to vector<16x1xf32>
    %303 = vector.extract_strided_slice %266 {offsets = [6, 0], sizes = [1, 256], strides = [1, 1]} : vector<8x256xf32> to vector<1x256xf32>
    %304 = vector.broadcast %302 : vector<16x1xf32> to vector<16x256xf32>
    %305 = vector.broadcast %303 : vector<1x256xf32> to vector<16x256xf32>
    %306 = arith.mulf %304, %305 : vector<16x256xf32>
    %307 = arith.addf %301, %306 : vector<16x256xf32>
    %308 = vector.extract_strided_slice %265 {offsets = [0, 7], sizes = [16, 1], strides = [1, 1]} : vector<16x8xf32> to vector<16x1xf32>
    %309 = vector.extract_strided_slice %266 {offsets = [7, 0], sizes = [1, 256], strides = [1, 1]} : vector<8x256xf32> to vector<1x256xf32>
    %310 = vector.broadcast %308 : vector<16x1xf32> to vector<16x256xf32>
    %311 = vector.broadcast %309 : vector<1x256xf32> to vector<16x256xf32>
    %312 = arith.mulf %310, %311 : vector<16x256xf32>
    %313 = arith.addf %307, %312 : vector<16x256xf32>
    %c0_24 = arith.constant 0 : index
    %c0_25 = arith.constant 0 : index
    %314 = vector.load %arg10[%c0_24, %c0_25] : memref<16x256xf32, #tpu.memory_space<vmem>>, vector<16x256xf32>
    tpu.vector_store %arg10[%c0_24, %c0_25], %313 {strides = array<i32>} : memref<16x256xf32, #tpu.memory_space<vmem>>, vector<16x256xf32>,
    return
  }
  func.func @transform_0(%arg0: i32) -> (i32, i32) {
    %c0_i32 = arith.constant 0 : i32
    %c0_i32_0 = arith.constant 0 : i32
    return %arg0, %c0_i32 : i32, i32
  }
  func.func @transform_1(%arg0: i32) -> (i32, i32) {
    %c0_i32 = arith.constant 0 : i32
    %c0_i32_0 = arith.constant 0 : i32
    %c0_i32_1 = arith.constant 0 : i32
    return %c0_i32, %c0_i32_0 : i32, i32
  }
  func.func @transform_2(%arg0: i32) -> (i32, i32) {
    %c0_i32 = arith.constant 0 : i32
    %c0_i32_0 = arith.constant 0 : i32
    %c0_i32_1 = arith.constant 0 : i32
    return %c0_i32, %c0_i32_0 : i32, i32
  }
  func.func @transform_3(%arg0: i32) -> (i32, i32) {
    %c0_i32 = arith.constant 0 : i32
    %c0_i32_0 = arith.constant 0 : i32
    %c0_i32_1 = arith.constant 0 : i32
    return %c0_i32, %c0_i32_0 : i32, i32
  }
  func.func @transform_4(%arg0: i32) -> (i32, i32) {
    %c0_i32 = arith.constant 0 : i32
    %c0_i32_0 = arith.constant 0 : i32
    %c0_i32_1 = arith.constant 0 : i32
    return %c0_i32, %c0_i32_0 : i32, i32
  }
  func.func @transform_5(%arg0: i32) -> (i32, i32) {
    %c0_i32 = arith.constant 0 : i32
    %c0_i32_0 = arith.constant 0 : i32
    %c0_i32_1 = arith.constant 0 : i32
    return %c0_i32, %c0_i32_0 : i32, i32
  }
  func.func @transform_6(%arg0: i32) -> (i32, i32) {
    %c0_i32 = arith.constant 0 : i32
    %c0_i32_0 = arith.constant 0 : i32
    %c0_i32_1 = arith.constant 0 : i32
    return %c0_i32, %c0_i32_0 : i32, i32
  }
  func.func @transform_7(%arg0: i32) -> (i32, i32) {
    %c0_i32 = arith.constant 0 : i32
    %c0_i32_0 = arith.constant 0 : i32
    %c0_i32_1 = arith.constant 0 : i32
    return %c0_i32, %c0_i32_0 : i32, i32
  }
  func.func @transform_8(%arg0: i32) -> (i32, i32) {
    %c0_i32 = arith.constant 0 : i32
    %c0_i32_0 = arith.constant 0 : i32
    %c0_i32_1 = arith.constant 0 : i32
    return %c0_i32, %c0_i32_0 : i32, i32
  }
  func.func @transform_9(%arg0: i32) -> (i32, i32) {
    %c0_i32 = arith.constant 0 : i32
    %c0_i32_0 = arith.constant 0 : i32
    return %arg0, %c0_i32 : i32, i32
  }
}

</mosaic_0001>

<llo_original>
// kernel: frequency_transform.1
$region0: #{frequency_transform.1}
  #allocation0 [shape = 'u32[]', space=smem, size = 0x4, offset = 0x4, fixed_abs, tag = 'smem constant byte address 0x4 - core index']
  #allocation1 [shape = 'u32[72,128]{1,0:T(1,128)}', space=vmem, size = 0x9000, scoped, tag = 'internal scratch']
  %s0 = inlined_call_operand.vmem [shape: f32[8,256], index: 0, kind: input, shape index: {}]
  %s1 = inlined_call_operand.vmem [shape: f32[8,8], index: 1, kind: input, shape index: {}]
  %s2 = inlined_call_operand.hbm [shape: f32[256,288], index: 2, kind: input, shape index: {}]
  %s3 = inlined_call_operand.vmem [shape: f32[8,8], index: 3, kind: input, shape index: {}]
  %s4 = inlined_call_operand.vmem [shape: f32[8,8], index: 4, kind: input, shape index: {}]
  %s5 = inlined_call_operand.vmem [shape: f32[8,8], index: 5, kind: input, shape index: {}]
  %s6 = inlined_call_operand.vmem [shape: f32[8,8], index: 6, kind: input, shape index: {}]
  %s7 = inlined_call_operand.hbm [shape: f32[288,256], index: 7, kind: input, shape index: {}]
  %s8 = inlined_call_operand.vmem [shape: f32[16,8], index: 8, kind: input, shape index: {}]
  %s9 = inlined_call_operand.vmem [shape: f32[16,256], index: 9, kind: output, shape index: {}]
  %s10 = sld [smem:[#allocation0]]
  $region54: #{frequency_transform.1} parent=0
    _
  %s12 = ssub.s32 1, %s10
  %s13 = scalar_select 0, %s12, %s10
  $region1: #{frequency_transform.1} parent=0
    #allocation2 [shape = 'u8[393216]{0}', space=vmem, size = 0x60000, scoped, tag = 'input window, operand 2, single buffered']
    #allocation3 [shape = 's32[1]{0}', space=sflag, size = 0x4, scoped, tag = 'scoped memory for frequency_transform.1']
    #allocation4 [shape = 'u8[294912]{0}', space=vmem, size = 0x48000, scoped, tag = 'input window, operand 7, single buffered']
    #allocation5 [shape = 's32[1]{0}', space=sflag, size = 0x4, scoped, tag = 'scoped memory for frequency_transform.1']
    %14 = vsyncpa [#allocation3], 0
    %15 = vsyncpa [#allocation5], 0
    // Predicated region
    $region2: #{frequency_transform.1} parent=1 // pred_check
      _
    $region3: #{frequency_transform.1} parent=1 // pred_check_branch
      %17 = sbr.rel (0) target = $region5
    $region4: #{frequency_transform.1} parent=1 // pred_region
      _
    $region5: #{frequency_transform.1} parent=1 // pred_fallthru
      _
    // Predicated region
    $region6: #{frequency_transform.1} parent=1 // pred_check
      _
    $region7: #{frequency_transform.1} parent=1 // pred_check_branch
      %19 = sbr.rel (0) target = $region9
    $region8: #{frequency_transform.1} parent=1 // pred_region
      _
    $region9: #{frequency_transform.1} parent=1 // pred_fallthru
      _
    // Predicated region
    $region10: #{frequency_transform.1} parent=1 // pred_check
      _
    $region11: #{frequency_transform.1} parent=1 // pred_check_branch
      %21 = sbr.rel (0) target = $region13
    $region12: #{frequency_transform.1} parent=1 // pred_region
      %23 = vsyncadd [#allocation3], 0
      %s24 = sshll.u32 %s2, 4
      %s25 = int_to_ptr.hbm [resolvable:$true] %s24
      %s26 = sshll.u32 [#allocation2], 4
      %s27 = int_to_ptr.vmem [resolvable:$true] %s26
      %32 = dma.hbm_to_vmem [thread:$0]  %s25, 12288, %s27, [#allocation3], 384, 384, 24
    $region13: #{frequency_transform.1} parent=1 // pred_fallthru
      _
    // Predicated region
    $region14: #{frequency_transform.1} parent=1 // pred_check
      _
    $region15: #{frequency_transform.1} parent=1 // pred_check_branch
      %34 = sbr.rel (0) target = $region17
    $region16: #{frequency_transform.1} parent=1 // pred_region
      _
    $region17: #{frequency_transform.1} parent=1 // pred_fallthru
      _
    // Predicated region
    $region18: #{frequency_transform.1} parent=1 // pred_check
      _
    $region19: #{frequency_transform.1} parent=1 // pred_check_branch
      %36 = sbr.rel (0) target = $region21
    $region20: #{frequency_transform.1} parent=1 // pred_region
      _
    $region21: #{frequency_transform.1} parent=1 // pred_fallthru
      _
    // Predicated region
    $region22: #{frequency_transform.1} parent=1 // pred_check
      _
    $region23: #{frequency_transform.1} parent=1 // pred_check_branch
      %38 = sbr.rel (0) target = $region25
    $region24: #{frequency_transform.1} parent=1 // pred_region
      _
    $region25: #{frequency_transform.1} parent=1 // pred_fallthru
      _
    // Predicated region
    $region26: #{frequency_transform.1} parent=1 // pred_check
      _
    $region27: #{frequency_transform.1} parent=1 // pred_check_branch
      %40 = sbr.rel (0) target = $region29
    $region28: #{frequency_transform.1} parent=1 // pred_region
      _
    $region29: #{frequency_transform.1} parent=1 // pred_fallthru
      _
    // Predicated region
    $region30: #{frequency_transform.1} parent=1 // pred_check
      _
    $region31: #{frequency_transform.1} parent=1 // pred_check_branch
      %42 = sbr.rel (0) target = $region33
    $region32: #{frequency_transform.1} parent=1 // pred_region
      %44 = vsyncadd [#allocation5], 0
      %s45 = sshll.u32 %s7, 4
      %s46 = int_to_ptr.hbm [resolvable:$true] %s45
      %s47 = sshll.u32 [#allocation4], 4
      %s48 = int_to_ptr.vmem [resolvable:$true] %s47
      %53 = dma.hbm_to_vmem [thread:$0]  %s46, 9216, %s48, [#allocation5], 256, 256, 16
    $region33: #{frequency_transform.1} parent=1 // pred_fallthru
      _
    // Predicated region
    $region34: #{frequency_transform.1} parent=1 // pred_check
      _
    $region35: #{frequency_transform.1} parent=1 // pred_check_branch
      %55 = sbr.rel (0) target = $region37
    $region36: #{frequency_transform.1} parent=1 // pred_region
      _
    $region37: #{frequency_transform.1} parent=1 // pred_fallthru
      _
    // Predicated region
    $region38: #{frequency_transform.1} parent=1 // pred_check
      _
    $region39: #{frequency_transform.1} parent=1 // pred_check_branch
      %57 = sbr.rel (0) target = $region41
    $region40: #{frequency_transform.1} parent=1 // pred_region
      %59 = dma.done [#allocation3], 12288
    $region41: #{frequency_transform.1} parent=1 // pred_fallthru
      _
    // Predicated region
    $region42: #{frequency_transform.1} parent=1 // pred_check
      _
    $region43: #{frequency_transform.1} parent=1 // pred_check_branch
      %61 = sbr.rel (0) target = $region45
    $region44: #{frequency_transform.1} parent=1 // pred_region
      %63 = dma.done [#allocation5], 9216
    $region45: #{frequency_transform.1} parent=1 // pred_fallthru
      _
    %v64 = vld [vmem:[%s0] sm:$0xff]
    %v65 = vld [vmem:[%s0 + $0x8] sm:$0xff]
    %v66 = vld [vmem:[%s1] sm:$0xff]
    %68 = vset.pattern.permute.xlu0 0
    %69 = vperm.xlu0 %68, %v66
    %v70 = vpop.permute.xlu0 %69
    %v72 = vperm.slane %v64, 0
    %v73 = vperm.slane %v65, 0
    %v74 = vmul.f32 %v70, %v72
    %v75 = vmul.f32 %v70, %v73
    %76 = vset.pattern.permute.xlu0 1
    %77 = vperm.xlu0 %76, %v66
    %v78 = vpop.permute.xlu0 %77
    %v80 = vperm.slane %v64, 1
    %v81 = vperm.slane %v65, 1
    %v82 = vmul.f32 %v78, %v80
    %v83 = vmul.f32 %v78, %v81
    %v84 = vadd.f32 %v74, %v82
    %v85 = vadd.f32 %v75, %v83
    %86 = vset.pattern.permute.xlu0 2
    %87 = vperm.xlu0 %86, %v66
    %v88 = vpop.permute.xlu0 %87
    %v90 = vperm.slane %v64, 2
    %v91 = vperm.slane %v65, 2
    %v92 = vmul.f32 %v88, %v90
    %v93 = vmul.f32 %v88, %v91
    %v94 = vadd.f32 %v84, %v92
    %v95 = vadd.f32 %v85, %v93
    %96 = vset.pattern.permute.xlu0 3
    %97 = vperm.xlu0 %96, %v66
    %v98 = vpop.permute.xlu0 %97
    %v100 = vperm.slane %v64, 3
    %v101 = vperm.slane %v65, 3
    %v102 = vmul.f32 %v98, %v100
    %v103 = vmul.f32 %v98, %v101
    %v104 = vadd.f32 %v94, %v102
    %v105 = vadd.f32 %v95, %v103
    %106 = vset.pattern.permute.xlu0 4
    %107 = vperm.xlu0 %106, %v66
    %v108 = vpop.permute.xlu0 %107
    %v110 = vperm.slane %v64, 4
    %v111 = vperm.slane %v65, 4
    %v112 = vmul.f32 %v108, %v110
    %v113 = vmul.f32 %v108, %v111
    %v114 = vadd.f32 %v104, %v112
    %v115 = vadd.f32 %v105, %v113
    %116 = vset.pattern.permute.xlu0 5
    %117 = vperm.xlu0 %116, %v66
    %v118 = vpop.permute.xlu0 %117
    %v120 = vperm.slane %v64, 5
    %v121 = vperm.slane %v65, 5
    %v122 = vmul.f32 %v118, %v120
    %v123 = vmul.f32 %v118, %v121
    %v124 = vadd.f32 %v114, %v122
    %v125 = vadd.f32 %v115, %v123
    %126 = vset.pattern.permute.xlu0 6
    %127 = vperm.xlu0 %126, %v66
    %v128 = vpop.permute.xlu0 %127
    %v130 = vperm.slane %v64, 6
    %v131 = vperm.slane %v65, 6
    %v132 = vmul.f32 %v128, %v130
    %v133 = vmul.f32 %v128, %v131
    %v134 = vadd.f32 %v124, %v132
    %v135 = vadd.f32 %v125, %v133
    %136 = vset.pattern.permute.xlu0 7
    %137 = vperm.xlu0 %136, %v66
    %v138 = vpop.permute.xlu0 %137
    %v140 = vperm.slane %v64, 7
    %v141 = vperm.slane %v65, 7
    %v142 = vmul.f32 %v138, %v140
    %v143 = vmul.f32 %v138, %v141
    %v144 = vadd.f32 %v134, %v142
    %v145 = vadd.f32 %v135, %v143
    %vm146 = vcmp.ge.f32.partialorder %v144, 0.0
    %vm147 = vcmp.ge.f32.partialorder %v145, 0.0
    %v148 = vmul.f32 %v144, 0.2
    %v149 = vmul.f32 %v145, 0.2
    %v150 = vsel %vm146, %v144, %v148
    %v151 = vsel %vm147, %v145, %v149
    %v152 = vld [vmem:[#allocation2] sm:$0xff]
    %v153 = vld [vmem:[#allocation2 + $0x8] sm:$0xff]
    %v154 = vld [vmem:[#allocation2 + $0x10] sm:$0xff]
    %v155 = vld [vmem:[#allocation2 + $0x18] sm:$0xff]
    %v156 = vld [vmem:[#allocation2 + $0x20] sm:$0xff]
    %v157 = vld [vmem:[#allocation2 + $0x28] sm:$0xff]
    %v158 = vld [vmem:[#allocation2 + $0x30] sm:$0xff]
    %v159 = vld [vmem:[#allocation2 + $0x38] sm:$0xff]
    %v160 = vld [vmem:[#allocation2 + $0x40] sm:$0xff]
    %v161 = vld [vmem:[#allocation2 + $0x48] sm:$0xff]
    %v162 = vld [vmem:[#allocation2 + $0x50] sm:$0xff]
    %v163 = vld [vmem:[#allocation2 + $0x58] sm:$0xff]
    %v164 = vld [vmem:[#allocation2 + $0x60] sm:$0xff]
    %v165 = vld [vmem:[#allocation2 + $0x68] sm:$0xff]
    %v166 = vld [vmem:[#allocation2 + $0x70] sm:$0xff]
    %v167 = vld [vmem:[#allocation2 + $0x78] sm:$0xff]
    %v168 = vld [vmem:[#allocation2 + $0x80] sm:$0xff]
    %v169 = vld [vmem:[#allocation2 + $0x88] sm:$0xff]
    %v170 = vld [vmem:[#allocation2 + $0x90] sm:$0xff]
    %v171 = vld [vmem:[#allocation2 + $0x98] sm:$0xff]
    %v172 = vld [vmem:[#allocation2 + $0xa0] sm:$0xff]
    %v173 = vld [vmem:[#allocation2 + $0xa8] sm:$0xff]
    %v174 = vld [vmem:[#allocation2 + $0xb0] sm:$0xff]
    %v175 = vld [vmem:[#allocation2 + $0xb8] sm:$0xff]
    %v176 = vld [vmem:[#allocation2 + $0xc0] sm:$0xff]
    %v177 = vld [vmem:[#allocation2 + $0xc8] sm:$0xff]
    %v178 = vld [vmem:[#allocation2 + $0xd0] sm:$0xff]
    %v179 = vld [vmem:[#allocation2 + $0xd8] sm:$0xff]
    %v180 = vld [vmem:[#allocation2 + $0xe0] sm:$0xff]
    %v181 = vld [vmem:[#allocation2 + $0xe8] sm:$0xff]
    %v182 = vld [vmem:[#allocation2 + $0xf0] sm:$0xff]
    %v183 = vld [vmem:[#allocation2 + $0xf8] sm:$0xff]
    %v184 = vld [vmem:[#allocation2 + $0x100] sm:$0xff]
    %v185 = vld [vmem:[#allocation2 + $0x108] sm:$0xff]
    %v186 = vld [vmem:[#allocation2 + $0x110] sm:$0xff]
    %v187 = vld [vmem:[#allocation2 + $0x118] sm:$0xff]
    %v188 = vld [vmem:[#allocation2 + $0x120] sm:$0xff]
    %v189 = vld [vmem:[#allocation2 + $0x128] sm:$0xff]
    %v190 = vld [vmem:[#allocation2 + $0x130] sm:$0xff]
    %v191 = vld [vmem:[#allocation2 + $0x138] sm:$0xff]
    %v192 = vld [vmem:[#allocation2 + $0x140] sm:$0xff]
    %v193 = vld [vmem:[#allocation2 + $0x148] sm:$0xff]
    %v194 = vld [vmem:[#allocation2 + $0x150] sm:$0xff]
    %v195 = vld [vmem:[#allocation2 + $0x158] sm:$0xff]
    %v196 = vld [vmem:[#allocation2 + $0x160] sm:$0xff]
    %v197 = vld [vmem:[#allocation2 + $0x168] sm:$0xff]
    %v198 = vld [vmem:[#allocation2 + $0x170] sm:$0xff]
    %v199 = vld [vmem:[#allocation2 + $0x178] sm:$0xff]
    %v200 = vld [vmem:[#allocation2 + $0x180] sm:$0xff]
    %v201 = vld [vmem:[#allocation2 + $0x188] sm:$0xff]
    %v202 = vld [vmem:[#allocation2 + $0x190] sm:$0xff]
    %v203 = vld [vmem:[#allocation2 + $0x198] sm:$0xff]
    %v204 = vld [vmem:[#allocation2 + $0x1a0] sm:$0xff]
    %v205 = vld [vmem:[#allocation2 + $0x1a8] sm:$0xff]
    %v206 = vld [vmem:[#allocation2 + $0x1b0] sm:$0xff]
    %v207 = vld [vmem:[#allocation2 + $0x1b8] sm:$0xff]
    %v208 = vld [vmem:[#allocation2 + $0x1c0] sm:$0xff]
    %v209 = vld [vmem:[#allocation2 + $0x1c8] sm:$0xff]
    %v210 = vld [vmem:[#allocation2 + $0x1d0] sm:$0xff]
    %v211 = vld [vmem:[#allocation2 + $0x1d8] sm:$0xff]
    %v212 = vld [vmem:[#allocation2 + $0x1e0] sm:$0xff]
    %v213 = vld [vmem:[#allocation2 + $0x1e8] sm:$0xff]
    %v214 = vld [vmem:[#allocation2 + $0x1f0] sm:$0xff]
    %v215 = vld [vmem:[#allocation2 + $0x1f8] sm:$0xff]
    %v216 = vld [vmem:[#allocation2 + $0x200] sm:$0xff]
    %v217 = vld [vmem:[#allocation2 + $0x208] sm:$0xff]
    %v218 = vld [vmem:[#allocation2 + $0x210] sm:$0xff]
    %v219 = vld [vmem:[#allocation2 + $0x218] sm:$0xff]
    %v220 = vld [vmem:[#allocation2 + $0x220] sm:$0xff]
    %v221 = vld [vmem:[#allocation2 + $0x228] sm:$0xff]
    %v222 = vld [vmem:[#allocation2 + $0x230] sm:$0xff]
    %v223 = vld [vmem:[#allocation2 + $0x238] sm:$0xff]
    %v224 = vld [vmem:[#allocation2 + $0x240] sm:$0xff]
    %v225 = vld [vmem:[#allocation2 + $0x248] sm:$0xff]
    %v226 = vld [vmem:[#allocation2 + $0x250] sm:$0xff]
    %v227 = vld [vmem:[#allocation2 + $0x258] sm:$0xff]
    %v228 = vld [vmem:[#allocation2 + $0x260] sm:$0xff]
    %v229 = vld [vmem:[#allocation2 + $0x268] sm:$0xff]
    %v230 = vld [vmem:[#allocation2 + $0x270] sm:$0xff]
    %v231 = vld [vmem:[#allocation2 + $0x278] sm:$0xff]
    %v232 = vld [vmem:[#allocation2 + $0x280] sm:$0xff]
    %v233 = vld [vmem:[#allocation2 + $0x288] sm:$0xff]
    %v234 = vld [vmem:[#allocation2 + $0x290] sm:$0xff]
    %v235 = vld [vmem:[#allocation2 + $0x298] sm:$0xff]
    %v236 = vld [vmem:[#allocation2 + $0x2a0] sm:$0xff]
    %v237 = vld [vmem:[#allocation2 + $0x2a8] sm:$0xff]
    %v238 = vld [vmem:[#allocation2 + $0x2b0] sm:$0xff]
    %v239 = vld [vmem:[#allocation2 + $0x2b8] sm:$0xff]
    %v240 = vld [vmem:[#allocation2 + $0x2c0] sm:$0xff]
    %v241 = vld [vmem:[#allocation2 + $0x2c8] sm:$0xff]
    %v242 = vld [vmem:[#allocation2 + $0x2d0] sm:$0xff]
    %v243 = vld [vmem:[#allocation2 + $0x2d8] sm:$0xff]
    %v244 = vld [vmem:[#allocation2 + $0x2e0] sm:$0xff]
    %v245 = vld [vmem:[#allocation2 + $0x2e8] sm:$0xff]
    %v246 = vld [vmem:[#allocation2 + $0x2f0] sm:$0xff]
    %v247 = vld [vmem:[#allocation2 + $0x2f8] sm:$0xff]
    %248 = vmatpush.msra.mxu0 %v197
    %249 = vmatpush.msra.mxu0 %v194
    %250 = vmatpush.msra.mxu0 %v191
    %251 = vmatpush.msra.mxu0 %v188
    %252 = vmatpush.msra.mxu0 %v185
    %253 = vmatpush.msra.mxu0 %v182
    %254 = vmatpush.msra.mxu0 %v179
    %255 = vmatpush.msra.mxu0 %v176
    %256 = vmatpush.msra.mxu0 %v173
    %257 = vmatpush.msra.mxu0 %v170
    %258 = vmatpush.msra.mxu0 %v167
    %259 = vmatpush.msra.mxu0 %v164
    %260 = vmatpush.msra.mxu0 %v161
    %261 = vmatpush.msra.mxu0 %v158
    %262 = vmatpush.msra.mxu0 %v155
    %263 = vmatpush.msra.mxu0 %v152
    %264 = vmatmul.f32.gmra.mxu0 %v150
    %v265 = vpop.f32.mrf.mxu0
    %v266 = vadd.f32 0.0, %v265
    %267 = vdwg.mxu0
    %268 = vmatpush.msra.mxu0 %v245
    %269 = vmatpush.msra.mxu0 %v242
    %270 = vmatpush.msra.mxu0 %v239
    %271 = vmatpush.msra.mxu0 %v236
    %272 = vmatpush.msra.mxu0 %v233
    %273 = vmatpush.msra.mxu0 %v230
    %274 = vmatpush.msra.mxu0 %v227
    %275 = vmatpush.msra.mxu0 %v224
    %276 = vmatpush.msra.mxu0 %v221
    %277 = vmatpush.msra.mxu0 %v218
    %278 = vmatpush.msra.mxu0 %v215
    %279 = vmatpush.msra.mxu0 %v212
    %280 = vmatpush.msra.mxu0 %v209
    %281 = vmatpush.msra.mxu0 %v206
    %282 = vmatpush.msra.mxu0 %v203
    %283 = vmatpush.msra.mxu0 %v200
    %284 = vmatmul.f32.gmra.mxu0 %v151
    %v285 = vpop.f32.mrf.mxu0
    %v286 = vadd.f32 %v266, %v285
    %287 = vdwg.mxu0
    %288 = vmatpush.msra.mxu0 %v198
    %289 = vmatpush.msra.mxu0 %v195
    %290 = vmatpush.msra.mxu0 %v192
    %291 = vmatpush.msra.mxu0 %v189
    %292 = vmatpush.msra.mxu0 %v186
    %293 = vmatpush.msra.mxu0 %v183
    %294 = vmatpush.msra.mxu0 %v180
    %295 = vmatpush.msra.mxu0 %v177
    %296 = vmatpush.msra.mxu0 %v174
    %297 = vmatpush.msra.mxu0 %v171
    %298 = vmatpush.msra.mxu0 %v168
    %299 = vmatpush.msra.mxu0 %v165
    %300 = vmatpush.msra.mxu0 %v162
    %301 = vmatpush.msra.mxu0 %v159
    %302 = vmatpush.msra.mxu0 %v156
    %303 = vmatpush.msra.mxu0 %v153
    %304 = vmatmul.f32.gmra.mxu0 %v150
    %v305 = vpop.f32.mrf.mxu0
    %v306 = vadd.f32 0.0, %v305
    %307 = vdwg.mxu0
    %308 = vmatpush.msra.mxu0 %v246
    %309 = vmatpush.msra.mxu0 %v243
    %310 = vmatpush.msra.mxu0 %v240
    %311 = vmatpush.msra.mxu0 %v237
    %312 = vmatpush.msra.mxu0 %v234
    %313 = vmatpush.msra.mxu0 %v231
    %314 = vmatpush.msra.mxu0 %v228
    %315 = vmatpush.msra.mxu0 %v225
    %316 = vmatpush.msra.mxu0 %v222
    %317 = vmatpush.msra.mxu0 %v219
    %318 = vmatpush.msra.mxu0 %v216
    %319 = vmatpush.msra.mxu0 %v213
    %320 = vmatpush.msra.mxu0 %v210
    %321 = vmatpush.msra.mxu0 %v207
    %322 = vmatpush.msra.mxu0 %v204
    %323 = vmatpush.msra.mxu0 %v201
    %324 = vmatmul.f32.gmra.mxu0 %v151
    %v325 = vpop.f32.mrf.mxu0
    %v326 = vadd.f32 %v306, %v325
    %327 = vdwg.mxu0
    %328 = vmatpush.msra.mxu0 %v199
    %329 = vmatpush.msra.mxu0 %v196
    %330 = vmatpush.msra.mxu0 %v193
    %331 = vmatpush.msra.mxu0 %v190
    %332 = vmatpush.msra.mxu0 %v187
    %333 = vmatpush.msra.mxu0 %v184
    %334 = vmatpush.msra.mxu0 %v181
    %335 = vmatpush.msra.mxu0 %v178
    %336 = vmatpush.msra.mxu0 %v175
    %337 = vmatpush.msra.mxu0 %v172
    %338 = vmatpush.msra.mxu0 %v169
    %339 = vmatpush.msra.mxu0 %v166
    %340 = vmatpush.msra.mxu0 %v163
    %341 = vmatpush.msra.mxu0 %v160
    %342 = vmatpush.msra.mxu0 %v157
    %343 = vmatpush.msra.mxu0 %v154
    %344 = vmatmul.f32.gmra.mxu0 %v150
    %v345 = vpop.f32.mrf.mxu0
    %v346 = vadd.f32 0.0, %v345
    %347 = vdwg.mxu0
    %348 = vmatpush.msra.mxu0 %v247
    %349 = vmatpush.msra.mxu0 %v244
    %350 = vmatpush.msra.mxu0 %v241
    %351 = vmatpush.msra.mxu0 %v238
    %352 = vmatpush.msra.mxu0 %v235
    %353 = vmatpush.msra.mxu0 %v232
    %354 = vmatpush.msra.mxu0 %v229
    %355 = vmatpush.msra.mxu0 %v226
    %356 = vmatpush.msra.mxu0 %v223
    %357 = vmatpush.msra.mxu0 %v220
    %358 = vmatpush.msra.mxu0 %v217
    %359 = vmatpush.msra.mxu0 %v214
    %360 = vmatpush.msra.mxu0 %v211
    %361 = vmatpush.msra.mxu0 %v208
    %362 = vmatpush.msra.mxu0 %v205
    %363 = vmatpush.msra.mxu0 %v202
    %364 = vmatmul.f32.gmra.mxu0 %v151
    %v365 = vpop.f32.mrf.mxu0
    %v366 = vadd.f32 %v346, %v365
    %367 = vdwg.mxu0
    %v368 = vld [vmem:[%s3] sm:$0xff]
    %370 = vset.pattern.permute.xlu0 0
    %371 = vperm.xlu0 %370, %v368
    %v372 = vpop.permute.xlu0 %371
    %v374 = vperm.slane %v286, 0
    %v375 = vperm.slane %v326, 0
    %v376 = vmul.f32 %v372, %v374
    %v377 = vmul.f32 %v372, %v375
    %378 = vset.pattern.permute.xlu0 1
    %379 = vperm.xlu0 %378, %v368
    %v380 = vpop.permute.xlu0 %379
    %v382 = vperm.slane %v286, 1
    %v383 = vperm.slane %v326, 1
    %v384 = vmul.f32 %v380, %v382
    %v385 = vmul.f32 %v380, %v383
    %v386 = vadd.f32 %v376, %v384
    %v387 = vadd.f32 %v377, %v385
    %388 = vset.pattern.permute.xlu0 2
    %389 = vperm.xlu0 %388, %v368
    %v390 = vpop.permute.xlu0 %389
    %v392 = vperm.slane %v286, 2
    %v393 = vperm.slane %v326, 2
    %v394 = vmul.f32 %v390, %v392
    %v395 = vmul.f32 %v390, %v393
    %v396 = vadd.f32 %v386, %v394
    %v397 = vadd.f32 %v387, %v395
    %398 = vset.pattern.permute.xlu0 3
    %399 = vperm.xlu0 %398, %v368
    %v400 = vpop.permute.xlu0 %399
    %v402 = vperm.slane %v286, 3
    %v403 = vperm.slane %v326, 3
    %v404 = vmul.f32 %v400, %v402
    %v405 = vmul.f32 %v400, %v403
    %v406 = vadd.f32 %v396, %v404
    %v407 = vadd.f32 %v397, %v405
    %408 = vset.pattern.permute.xlu0 4
    %409 = vperm.xlu0 %408, %v368
    %v410 = vpop.permute.xlu0 %409
    %v412 = vperm.slane %v286, 4
    %v413 = vperm.slane %v326, 4
    %v414 = vmul.f32 %v410, %v412
    %v415 = vmul.f32 %v410, %v413
    %v416 = vadd.f32 %v406, %v414
    %v417 = vadd.f32 %v407, %v415
    %418 = vset.pattern.permute.xlu0 5
    %419 = vperm.xlu0 %418, %v368
    %v420 = vpop.permute.xlu0 %419
    %v422 = vperm.slane %v286, 5
    %v423 = vperm.slane %v326, 5
    %v424 = vmul.f32 %v420, %v422
    %v425 = vmul.f32 %v420, %v423
    %v426 = vadd.f32 %v416, %v424
    %v427 = vadd.f32 %v417, %v425
    %428 = vset.pattern.permute.xlu0 6
    %429 = vperm.xlu0 %428, %v368
    %v430 = vpop.permute.xlu0 %429
    %v432 = vperm.slane %v286, 6
    %v433 = vperm.slane %v326, 6
    %v434 = vmul.f32 %v430, %v432
    %v435 = vmul.f32 %v430, %v433
    %v436 = vadd.f32 %v426, %v434
    %v437 = vadd.f32 %v427, %v435
    %438 = vset.pattern.permute.xlu0 7
    %439 = vperm.xlu0 %438, %v368
    %v440 = vpop.permute.xlu0 %439
    %v442 = vperm.slane %v286, 7
    %v443 = vperm.slane %v326, 7
    %v444 = vmul.f32 %v440, %v442
    %v445 = vmul.f32 %v440, %v443
    %v446 = vadd.f32 %v436, %v444
    %v447 = vadd.f32 %v437, %v445
    %v448 = vld [vmem:[%s4] sm:$0xff]
    %450 = vset.pattern.permute.xlu0 0
    %451 = vperm.xlu0 %450, %v448
    %v452 = vpop.permute.xlu0 %451
    %v454 = vperm.slane %v366, 0
    %v455 = vmul.f32 %v452, %v375
    %v456 = vmul.f32 %v452, %v454
    %457 = vset.pattern.permute.xlu0 1
    %458 = vperm.xlu0 %457, %v448
    %v459 = vpop.permute.xlu0 %458
    %v461 = vperm.slane %v366, 1
    %v462 = vmul.f32 %v459, %v383
    %v463 = vmul.f32 %v459, %v461
    %v464 = vadd.f32 %v455, %v462
    %v465 = vadd.f32 %v456, %v463
    %466 = vset.pattern.permute.xlu0 2
    %467 = vperm.xlu0 %466, %v448
    %v468 = vpop.permute.xlu0 %467
    %v470 = vperm.slane %v366, 2
    %v471 = vmul.f32 %v468, %v393
    %v472 = vmul.f32 %v468, %v470
    %v473 = vadd.f32 %v464, %v471
    %v474 = vadd.f32 %v465, %v472
    %475 = vset.pattern.permute.xlu0 3
    %476 = vperm.xlu0 %475, %v448
    %v477 = vpop.permute.xlu0 %476
    %v479 = vperm.slane %v366, 3
    %v480 = vmul.f32 %v477, %v403
    %v481 = vmul.f32 %v477, %v479
    %v482 = vadd.f32 %v473, %v480
    %v483 = vadd.f32 %v474, %v481
    %484 = vset.pattern.permute.xlu0 4
    %485 = vperm.xlu0 %484, %v448
    %v486 = vpop.permute.xlu0 %485
    %v488 = vperm.slane %v366, 4
    %v489 = vmul.f32 %v486, %v413
    %v490 = vmul.f32 %v486, %v488
    %v491 = vadd.f32 %v482, %v489
    %v492 = vadd.f32 %v483, %v490
    %493 = vset.pattern.permute.xlu0 5
    %494 = vperm.xlu0 %493, %v448
    %v495 = vpop.permute.xlu0 %494
    %v497 = vperm.slane %v366, 5
    %v498 = vmul.f32 %v495, %v423
    %v499 = vmul.f32 %v495, %v497
    %v500 = vadd.f32 %v491, %v498
    %v501 = vadd.f32 %v492, %v499
    %502 = vset.pattern.permute.xlu0 6
    %503 = vperm.xlu0 %502, %v448
    %v504 = vpop.permute.xlu0 %503
    %v506 = vperm.slane %v366, 6
    %v507 = vmul.f32 %v504, %v433
    %v508 = vmul.f32 %v504, %v506
    %v509 = vadd.f32 %v500, %v507
    %v510 = vadd.f32 %v501, %v508
    %511 = vset.pattern.permute.xlu0 7
    %512 = vperm.xlu0 %511, %v448
    %v513 = vpop.permute.xlu0 %512
    %v515 = vperm.slane %v366, 7
    %v516 = vmul.f32 %v513, %v443
    %v517 = vmul.f32 %v513, %v515
    %v518 = vadd.f32 %v509, %v516
    %v519 = vadd.f32 %v510, %v517
    %522 = vrot.lane.b32.xlu0 %v518, 112
    %v523 = vpop.permute.xlu0 %522
    %524 = vrot.lane.b32.xlu0 %v519, 112
    %v525 = vpop.permute.xlu0 %524
    %vm526 = vcmask 916480
    %v527 = vsel %vm526, %v523, %v525
    %v530 = vadd.f32 %v446, %v527
    %v531 = vadd.f32 %v447, %v525
    %vm532 = vcmp.ge.f32.partialorder %v530, 0.0
    %vm533 = vcmp.ge.f32.partialorder %v531, 0.0
    %v534 = vmul.f32 %v530, 0.2
    %v535 = vmul.f32 %v531, 0.2
    %v536 = vsel %vm532, %v530, %v534
    %v537 = vsel %vm533, %v531, %v535
    %v538 = vld [vmem:[%s5] sm:$0xff]
    %540 = vset.pattern.permute.xlu0 0
    %541 = vperm.xlu0 %540, %v538
    %v542 = vpop.permute.xlu0 %541
    %v544 = vmul.f32 %v542, %v374
    %v545 = vmul.f32 %v542, %v375
    %546 = vset.pattern.permute.xlu0 1
    %547 = vperm.xlu0 %546, %v538
    %v548 = vpop.permute.xlu0 %547
    %v550 = vmul.f32 %v548, %v382
    %v551 = vmul.f32 %v548, %v383
    %v552 = vadd.f32 %v544, %v550
    %v553 = vadd.f32 %v545, %v551
    %554 = vset.pattern.permute.xlu0 2
    %555 = vperm.xlu0 %554, %v538
    %v556 = vpop.permute.xlu0 %555
    %v558 = vmul.f32 %v556, %v392
    %v559 = vmul.f32 %v556, %v393
    %v560 = vadd.f32 %v552, %v558
    %v561 = vadd.f32 %v553, %v559
    %562 = vset.pattern.permute.xlu0 3
    %563 = vperm.xlu0 %562, %v538
    %v564 = vpop.permute.xlu0 %563
    %v566 = vmul.f32 %v564, %v402
    %v567 = vmul.f32 %v564, %v403
    %v568 = vadd.f32 %v560, %v566
    %v569 = vadd.f32 %v561, %v567
    %570 = vset.pattern.permute.xlu0 4
    %571 = vperm.xlu0 %570, %v538
    %v572 = vpop.permute.xlu0 %571
    %v574 = vmul.f32 %v572, %v412
    %v575 = vmul.f32 %v572, %v413
    %v576 = vadd.f32 %v568, %v574
    %v577 = vadd.f32 %v569, %v575
    %578 = vset.pattern.permute.xlu0 5
    %579 = vperm.xlu0 %578, %v538
    %v580 = vpop.permute.xlu0 %579
    %v582 = vmul.f32 %v580, %v422
    %v583 = vmul.f32 %v580, %v423
    %v584 = vadd.f32 %v576, %v582
    %v585 = vadd.f32 %v577, %v583
    %586 = vset.pattern.permute.xlu0 6
    %587 = vperm.xlu0 %586, %v538
    %v588 = vpop.permute.xlu0 %587
    %v590 = vmul.f32 %v588, %v432
    %v591 = vmul.f32 %v588, %v433
    %v592 = vadd.f32 %v584, %v590
    %v593 = vadd.f32 %v585, %v591
    %594 = vset.pattern.permute.xlu0 7
    %595 = vperm.xlu0 %594, %v538
    %v596 = vpop.permute.xlu0 %595
    %v598 = vmul.f32 %v596, %v442
    %v599 = vmul.f32 %v596, %v443
    %v600 = vadd.f32 %v592, %v598
    %v601 = vadd.f32 %v593, %v599
    %v602 = vld [vmem:[%s6] sm:$0xff]
    %604 = vset.pattern.permute.xlu0 0
    %605 = vperm.xlu0 %604, %v602
    %v606 = vpop.permute.xlu0 %605
    %v608 = vmul.f32 %v606, %v375
    %v609 = vmul.f32 %v606, %v454
    %610 = vset.pattern.permute.xlu0 1
    %611 = vperm.xlu0 %610, %v602
    %v612 = vpop.permute.xlu0 %611
    %v614 = vmul.f32 %v612, %v383
    %v615 = vmul.f32 %v612, %v461
    %v616 = vadd.f32 %v608, %v614
    %v617 = vadd.f32 %v609, %v615
    %618 = vset.pattern.permute.xlu0 2
    %619 = vperm.xlu0 %618, %v602
    %v620 = vpop.permute.xlu0 %619
    %v622 = vmul.f32 %v620, %v393
    %v623 = vmul.f32 %v620, %v470
    %v624 = vadd.f32 %v616, %v622
    %v625 = vadd.f32 %v617, %v623
    %626 = vset.pattern.permute.xlu0 3
    %627 = vperm.xlu0 %626, %v602
    %v628 = vpop.permute.xlu0 %627
    %v630 = vmul.f32 %v628, %v403
    %v631 = vmul.f32 %v628, %v479
    %v632 = vadd.f32 %v624, %v630
    %v633 = vadd.f32 %v625, %v631
    %634 = vset.pattern.permute.xlu0 4
    %635 = vperm.xlu0 %634, %v602
    %v636 = vpop.permute.xlu0 %635
    %v638 = vmul.f32 %v636, %v413
    %v639 = vmul.f32 %v636, %v488
    %v640 = vadd.f32 %v632, %v638
    %v641 = vadd.f32 %v633, %v639
    %642 = vset.pattern.permute.xlu0 5
    %643 = vperm.xlu0 %642, %v602
    %v644 = vpop.permute.xlu0 %643
    %v646 = vmul.f32 %v644, %v423
    %v647 = vmul.f32 %v644, %v497
    %v648 = vadd.f32 %v640, %v646
    %v649 = vadd.f32 %v641, %v647
    %650 = vset.pattern.permute.xlu0 6
    %651 = vperm.xlu0 %650, %v602
    %v652 = vpop.permute.xlu0 %651
    %v654 = vmul.f32 %v652, %v433
    %v655 = vmul.f32 %v652, %v506
    %v656 = vadd.f32 %v648, %v654
    %v657 = vadd.f32 %v649, %v655
    %658 = vset.pattern.permute.xlu0 7
    %659 = vperm.xlu0 %658, %v602
    %v660 = vpop.permute.xlu0 %659
    %v662 = vmul.f32 %v660, %v443
    %v663 = vmul.f32 %v660, %v515
    %v664 = vadd.f32 %v656, %v662
    %v665 = vadd.f32 %v657, %v663
    %668 = vrot.lane.b32.xlu0 %v664, 112
    %v669 = vpop.permute.xlu0 %668
    %670 = vrot.lane.b32.xlu0 %v665, 112
    %v671 = vpop.permute.xlu0 %670
    %v672 = vsel %vm526, %v669, %v671
    %v675 = vadd.f32 %v600, %v672
    %v676 = vadd.f32 %v601, %v671
    %vm677 = vcmp.ge.f32.partialorder %v675, 0.0
    %vm678 = vcmp.ge.f32.partialorder %v676, 0.0
    %v679 = vmul.f32 %v675, 0.2
    %v680 = vmul.f32 %v676, 0.2
    %v681 = vsel %vm677, %v675, %v679
    %v682 = vsel %vm678, %v676, %v680
    %685 = vrot.lane.b32.xlu0 %v681, 16
    %v686 = vpop.permute.xlu0 %685
    %687 = vrot.lane.b32.xlu0 %v682, 16
    %v688 = vpop.permute.xlu0 %687
    %vm689 = vcmask 130048
    %v690 = vsel %vm689, %v686, %v688
    %v692 = vsel %vm689, %v537, %v686
    %v693 = vld [vmem:[#allocation4] sm:$0xff]
    %v694 = vld [vmem:[#allocation4 + $0x8] sm:$0xff]
    %v695 = vld [vmem:[#allocation4 + $0x10] sm:$0xff]
    %v696 = vld [vmem:[#allocation4 + $0x18] sm:$0xff]
    %v697 = vld [vmem:[#allocation4 + $0x20] sm:$0xff]
    %v698 = vld [vmem:[#allocation4 + $0x28] sm:$0xff]
    %v699 = vld [vmem:[#allocation4 + $0x30] sm:$0xff]
    %v700 = vld [vmem:[#allocation4 + $0x38] sm:$0xff]
    %v701 = vld [vmem:[#allocation4 + $0x40] sm:$0xff]
    %v702 = vld [vmem:[#allocation4 + $0x48] sm:$0xff]
    %v703 = vld [vmem:[#allocation4 + $0x50] sm:$0xff]
    %v704 = vld [vmem:[#allocation4 + $0x58] sm:$0xff]
    %v705 = vld [vmem:[#allocation4 + $0x60] sm:$0xff]
    %v706 = vld [vmem:[#allocation4 + $0x68] sm:$0xff]
    %v707 = vld [vmem:[#allocation4 + $0x70] sm:$0xff]
    %v708 = vld [vmem:[#allocation4 + $0x78] sm:$0xff]
    %v709 = vld [vmem:[#allocation4 + $0x80] sm:$0xff]
    %v710 = vld [vmem:[#allocation4 + $0x88] sm:$0xff]
    %v711 = vld [vmem:[#allocation4 + $0x90] sm:$0xff]
    %v712 = vld [vmem:[#allocation4 + $0x98] sm:$0xff]
    %v713 = vld [vmem:[#allocation4 + $0xa0] sm:$0xff]
    %v714 = vld [vmem:[#allocation4 + $0xa8] sm:$0xff]
    %v715 = vld [vmem:[#allocation4 + $0xb0] sm:$0xff]
    %v716 = vld [vmem:[#allocation4 + $0xb8] sm:$0xff]
    %v717 = vld [vmem:[#allocation4 + $0xc0] sm:$0xff]
    %v718 = vld [vmem:[#allocation4 + $0xc8] sm:$0xff]
    %v719 = vld [vmem:[#allocation4 + $0xd0] sm:$0xff]
    %v720 = vld [vmem:[#allocation4 + $0xd8] sm:$0xff]
    %v721 = vld [vmem:[#allocation4 + $0xe0] sm:$0xff]
    %v722 = vld [vmem:[#allocation4 + $0xe8] sm:$0xff]
    %v723 = vld [vmem:[#allocation4 + $0xf0] sm:$0xff]
    %v724 = vld [vmem:[#allocation4 + $0xf8] sm:$0xff]
    %v725 = vld [vmem:[#allocation4 + $0x100] sm:$0xff]
    %v726 = vld [vmem:[#allocation4 + $0x108] sm:$0xff]
    %v727 = vld [vmem:[#allocation4 + $0x110] sm:$0xff]
    %v728 = vld [vmem:[#allocation4 + $0x118] sm:$0xff]
    %v729 = vld [vmem:[#allocation4 + $0x120] sm:$0xff]
    %v730 = vld [vmem:[#allocation4 + $0x128] sm:$0xff]
    %v731 = vld [vmem:[#allocation4 + $0x130] sm:$0xff]
    %v732 = vld [vmem:[#allocation4 + $0x138] sm:$0xff]
    %v733 = vld [vmem:[#allocation4 + $0x140] sm:$0xff]
    %v734 = vld [vmem:[#allocation4 + $0x148] sm:$0xff]
    %v735 = vld [vmem:[#allocation4 + $0x150] sm:$0xff]
    %v736 = vld [vmem:[#allocation4 + $0x158] sm:$0xff]
    %v737 = vld [vmem:[#allocation4 + $0x160] sm:$0xff]
    %v738 = vld [vmem:[#allocation4 + $0x168] sm:$0xff]
    %v739 = vld [vmem:[#allocation4 + $0x170] sm:$0xff]
    %v740 = vld [vmem:[#allocation4 + $0x178] sm:$0xff]
    %v741 = vld [vmem:[#allocation4 + $0x180] sm:$0xff]
    %v742 = vld [vmem:[#allocation4 + $0x188] sm:$0xff]
    %v743 = vld [vmem:[#allocation4 + $0x190] sm:$0xff]
    %v744 = vld [vmem:[#allocation4 + $0x198] sm:$0xff]
    %v745 = vld [vmem:[#allocation4 + $0x1a0] sm:$0xff]
    %v746 = vld [vmem:[#allocation4 + $0x1a8] sm:$0xff]
    %v747 = vld [vmem:[#allocation4 + $0x1b0] sm:$0xff]
    %v748 = vld [vmem:[#allocation4 + $0x1b8] sm:$0xff]
    %v749 = vld [vmem:[#allocation4 + $0x1c0] sm:$0xff]
    %v750 = vld [vmem:[#allocation4 + $0x1c8] sm:$0xff]
    %v751 = vld [vmem:[#allocation4 + $0x1d0] sm:$0xff]
    %v752 = vld [vmem:[#allocation4 + $0x1d8] sm:$0xff]
    %v753 = vld [vmem:[#allocation4 + $0x1e0] sm:$0xff]
    %v754 = vld [vmem:[#allocation4 + $0x1e8] sm:$0xff]
    %v755 = vld [vmem:[#allocation4 + $0x1f0] sm:$0xff]
    %v756 = vld [vmem:[#allocation4 + $0x1f8] sm:$0xff]
    %v757 = vld [vmem:[#allocation4 + $0x200] sm:$0xff]
    %v758 = vld [vmem:[#allocation4 + $0x208] sm:$0xff]
    %v759 = vld [vmem:[#allocation4 + $0x210] sm:$0xff]
    %v760 = vld [vmem:[#allocation4 + $0x218] sm:$0xff]
    %v761 = vld [vmem:[#allocation4 + $0x220] sm:$0xff]
    %v762 = vld [vmem:[#allocation4 + $0x228] sm:$0xff]
    %v763 = vld [vmem:[#allocation4 + $0x230] sm:$0xff]
    %v764 = vld [vmem:[#allocation4 + $0x238] sm:$0xff]
    %vm765 = vcmask 261120
    %v766 = vsel %vm765, %v690, 0
    %768 = vmatpush.msra.mxu0 %v723
    %769 = vmatpush.msra.mxu0 %v721
    %770 = vmatpush.msra.mxu0 %v719
    %771 = vmatpush.msra.mxu0 %v717
    %772 = vmatpush.msra.mxu0 %v715
    %773 = vmatpush.msra.mxu0 %v713
    %774 = vmatpush.msra.mxu0 %v711
    %775 = vmatpush.msra.mxu0 %v709
    %776 = vmatpush.msra.mxu0 %v707
    %777 = vmatpush.msra.mxu0 %v705
    %778 = vmatpush.msra.mxu0 %v703
    %779 = vmatpush.msra.mxu0 %v701
    %780 = vmatpush.msra.mxu0 %v699
    %781 = vmatpush.msra.mxu0 %v697
    %782 = vmatpush.msra.mxu0 %v695
    %783 = vmatpush.msra.mxu0 %v693
    %784 = vmatmul.f32.gmra.mxu0 %v536
    %v785 = vpop.f32.mrf.mxu0
    %v786 = vadd.f32 0.0, %v785
    %787 = vdwg.mxu0
    %788 = vmatpush.msra.mxu0 %v755
    %789 = vmatpush.msra.mxu0 %v753
    %790 = vmatpush.msra.mxu0 %v751
    %791 = vmatpush.msra.mxu0 %v749
    %792 = vmatpush.msra.mxu0 %v747
    %793 = vmatpush.msra.mxu0 %v745
    %794 = vmatpush.msra.mxu0 %v743
    %795 = vmatpush.msra.mxu0 %v741
    %796 = vmatpush.msra.mxu0 %v739
    %797 = vmatpush.msra.mxu0 %v737
    %798 = vmatpush.msra.mxu0 %v735
    %799 = vmatpush.msra.mxu0 %v733
    %800 = vmatpush.msra.mxu0 %v731
    %801 = vmatpush.msra.mxu0 %v729
    %802 = vmatpush.msra.mxu0 %v727
    %803 = vmatpush.msra.mxu0 %v725
    %804 = vmatmul.f32.gmra.mxu0 %v692
    %v805 = vpop.f32.mrf.mxu0
    %v806 = vadd.f32 %v786, %v805
    %807 = vdwg.mxu0
    %808 = vmatpush.msra.mxu0 0.0
    %809 = vmatpush.msra.mxu0 0.0
    %810 = vmatpush.msra.mxu0 0.0
    %811 = vmatpush.msra.mxu0 0.0
    %812 = vmatpush.msra.mxu0 0.0
    %813 = vmatpush.msra.mxu0 0.0
    %814 = vmatpush.msra.mxu0 0.0
    %815 = vmatpush.msra.mxu0 0.0
    %816 = vmatpush.msra.mxu0 0.0
    %817 = vmatpush.msra.mxu0 0.0
    %818 = vmatpush.msra.mxu0 0.0
    %819 = vmatpush.msra.mxu0 0.0
    %820 = vmatpush.msra.mxu0 %v763
    %821 = vmatpush.msra.mxu0 %v761
    %822 = vmatpush.msra.mxu0 %v759
    %823 = vmatpush.msra.mxu0 %v757
    %824 = vmatmul.f32.gmra.mxu0 %v766
    %v825 = vpop.f32.mrf.mxu0
    %v826 = vadd.f32 %v806, %v825
    %827 = vdwg.mxu0
    %828 = vmatpush.msra.mxu0 %v724
    %829 = vmatpush.msra.mxu0 %v722
    %830 = vmatpush.msra.mxu0 %v720
    %831 = vmatpush.msra.mxu0 %v718
    %832 = vmatpush.msra.mxu0 %v716
    %833 = vmatpush.msra.mxu0 %v714
    %834 = vmatpush.msra.mxu0 %v712
    %835 = vmatpush.msra.mxu0 %v710
    %836 = vmatpush.msra.mxu0 %v708
    %837 = vmatpush.msra.mxu0 %v706
    %838 = vmatpush.msra.mxu0 %v704
    %839 = vmatpush.msra.mxu0 %v702
    %840 = vmatpush.msra.mxu0 %v700
    %841 = vmatpush.msra.mxu0 %v698
    %842 = vmatpush.msra.mxu0 %v696
    %843 = vmatpush.msra.mxu0 %v694
    %844 = vmatmul.f32.gmra.mxu0 %v536
    %v845 = vpop.f32.mrf.mxu0
    %v846 = vadd.f32 0.0, %v845
    %847 = vdwg.mxu0
    %848 = vmatpush.msra.mxu0 %v756
    %849 = vmatpush.msra.mxu0 %v754
    %850 = vmatpush.msra.mxu0 %v752
    %851 = vmatpush.msra.mxu0 %v750
    %852 = vmatpush.msra.mxu0 %v748
    %853 = vmatpush.msra.mxu0 %v746
    %854 = vmatpush.msra.mxu0 %v744
    %855 = vmatpush.msra.mxu0 %v742
    %856 = vmatpush.msra.mxu0 %v740
    %857 = vmatpush.msra.mxu0 %v738
    %858 = vmatpush.msra.mxu0 %v736
    %859 = vmatpush.msra.mxu0 %v734
    %860 = vmatpush.msra.mxu0 %v732
    %861 = vmatpush.msra.mxu0 %v730
    %862 = vmatpush.msra.mxu0 %v728
    %863 = vmatpush.msra.mxu0 %v726
    %864 = vmatmul.f32.gmra.mxu0 %v692
    %v865 = vpop.f32.mrf.mxu0
    %v866 = vadd.f32 %v846, %v865
    %867 = vdwg.mxu0
    %868 = vmatpush.msra.mxu0 0.0
    %869 = vmatpush.msra.mxu0 0.0
    %870 = vmatpush.msra.mxu0 0.0
    %871 = vmatpush.msra.mxu0 0.0
    %872 = vmatpush.msra.mxu0 0.0
    %873 = vmatpush.msra.mxu0 0.0
    %874 = vmatpush.msra.mxu0 0.0
    %875 = vmatpush.msra.mxu0 0.0
    %876 = vmatpush.msra.mxu0 0.0
    %877 = vmatpush.msra.mxu0 0.0
    %878 = vmatpush.msra.mxu0 0.0
    %879 = vmatpush.msra.mxu0 0.0
    %880 = vmatpush.msra.mxu0 %v764
    %881 = vmatpush.msra.mxu0 %v762
    %882 = vmatpush.msra.mxu0 %v760
    %883 = vmatpush.msra.mxu0 %v758
    %884 = vmatmul.f32.gmra.mxu0 %v766
    %v885 = vpop.f32.mrf.mxu0
    %v886 = vadd.f32 %v866, %v885
    %887 = vdwg.mxu0
    %v888 = vld [vmem:[%s8] sm:$0xff]
    %v889 = vld [vmem:[%s8 + $0x8] sm:$0xff]
    %v890 = vadd.f32 %v150, %v826
    %v891 = vadd.f32 %v151, %v886
    %893 = vset.pattern.permute.xlu0 0
    %894 = vperm.xlu0 %893, %v888
    %v895 = vpop.permute.xlu0 %894
    %898 = vset.pattern.permute.xlu0 0
    %899 = vperm.xlu0 %898, %v889
    %v900 = vpop.permute.xlu0 %899
    %v902 = vperm.slane %v890, 0
    %v903 = vperm.slane %v891, 0
    %v904 = vmul.f32 %v895, %v902
    %v905 = vmul.f32 %v895, %v903
    %v906 = vmul.f32 %v900, %v902
    %v907 = vmul.f32 %v900, %v903
    %908 = vset.pattern.permute.xlu0 1
    %909 = vperm.xlu0 %908, %v888
    %v910 = vpop.permute.xlu0 %909
    %912 = vset.pattern.permute.xlu0 1
    %913 = vperm.xlu0 %912, %v889
    %v914 = vpop.permute.xlu0 %913
    %v916 = vperm.slane %v890, 1
    %v917 = vperm.slane %v891, 1
    %v918 = vmul.f32 %v910, %v916
    %v919 = vmul.f32 %v910, %v917
    %v920 = vmul.f32 %v914, %v916
    %v921 = vmul.f32 %v914, %v917
    %v922 = vadd.f32 %v904, %v918
    %v923 = vadd.f32 %v905, %v919
    %v924 = vadd.f32 %v906, %v920
    %v925 = vadd.f32 %v907, %v921
    %926 = vset.pattern.permute.xlu0 2
    %927 = vperm.xlu0 %926, %v888
    %v928 = vpop.permute.xlu0 %927
    %930 = vset.pattern.permute.xlu0 2
    %931 = vperm.xlu0 %930, %v889
    %v932 = vpop.permute.xlu0 %931
    %v934 = vperm.slane %v890, 2
    %v935 = vperm.slane %v891, 2
    %v936 = vmul.f32 %v928, %v934
    %v937 = vmul.f32 %v928, %v935
    %v938 = vmul.f32 %v932, %v934
    %v939 = vmul.f32 %v932, %v935
    %v940 = vadd.f32 %v922, %v936
    %v941 = vadd.f32 %v923, %v937
    %v942 = vadd.f32 %v924, %v938
    %v943 = vadd.f32 %v925, %v939
    %944 = vset.pattern.permute.xlu0 3
    %945 = vperm.xlu0 %944, %v888
    %v946 = vpop.permute.xlu0 %945
    %948 = vset.pattern.permute.xlu0 3
    %949 = vperm.xlu0 %948, %v889
    %v950 = vpop.permute.xlu0 %949
    %v952 = vperm.slane %v890, 3
    %v953 = vperm.slane %v891, 3
    %v954 = vmul.f32 %v946, %v952
    %v955 = vmul.f32 %v946, %v953
    %v956 = vmul.f32 %v950, %v952
    %v957 = vmul.f32 %v950, %v953
    %v958 = vadd.f32 %v940, %v954
    %v959 = vadd.f32 %v941, %v955
    %v960 = vadd.f32 %v942, %v956
    %v961 = vadd.f32 %v943, %v957
    %962 = vset.pattern.permute.xlu0 4
    %963 = vperm.xlu0 %962, %v888
    %v964 = vpop.permute.xlu0 %963
    %966 = vset.pattern.permute.xlu0 4
    %967 = vperm.xlu0 %966, %v889
    %v968 = vpop.permute.xlu0 %967
    %v970 = vperm.slane %v890, 4
    %v971 = vperm.slane %v891, 4
    %v972 = vmul.f32 %v964, %v970
    %v973 = vmul.f32 %v964, %v971
    %v974 = vmul.f32 %v968, %v970
    %v975 = vmul.f32 %v968, %v971
    %v976 = vadd.f32 %v958, %v972
    %v977 = vadd.f32 %v959, %v973
    %v978 = vadd.f32 %v960, %v974
    %v979 = vadd.f32 %v961, %v975
    %980 = vset.pattern.permute.xlu0 5
    %981 = vperm.xlu0 %980, %v888
    %v982 = vpop.permute.xlu0 %981
    %984 = vset.pattern.permute.xlu0 5
    %985 = vperm.xlu0 %984, %v889
    %v986 = vpop.permute.xlu0 %985
    %v988 = vperm.slane %v890, 5
    %v989 = vperm.slane %v891, 5
    %v990 = vmul.f32 %v982, %v988
    %v991 = vmul.f32 %v982, %v989
    %v992 = vmul.f32 %v986, %v988
    %v993 = vmul.f32 %v986, %v989
    %v994 = vadd.f32 %v976, %v990
    %v995 = vadd.f32 %v977, %v991
    %v996 = vadd.f32 %v978, %v992
    %v997 = vadd.f32 %v979, %v993
    %998 = vset.pattern.permute.xlu0 6
    %999 = vperm.xlu0 %998, %v888
    %v1000 = vpop.permute.xlu0 %999
    %1002 = vset.pattern.permute.xlu0 6
    %1003 = vperm.xlu0 %1002, %v889
    %v1004 = vpop.permute.xlu0 %1003
    %v1006 = vperm.slane %v890, 6
    %v1007 = vperm.slane %v891, 6
    %v1008 = vmul.f32 %v1000, %v1006
    %v1009 = vmul.f32 %v1000, %v1007
    %v1010 = vmul.f32 %v1004, %v1006
    %v1011 = vmul.f32 %v1004, %v1007
    %v1012 = vadd.f32 %v994, %v1008
    %v1013 = vadd.f32 %v995, %v1009
    %v1014 = vadd.f32 %v996, %v1010
    %v1015 = vadd.f32 %v997, %v1011
    %1016 = vset.pattern.permute.xlu0 7
    %1017 = vperm.xlu0 %1016, %v888
    %v1018 = vpop.permute.xlu0 %1017
    %1020 = vset.pattern.permute.xlu0 7
    %1021 = vperm.xlu0 %1020, %v889
    %v1022 = vpop.permute.xlu0 %1021
    %v1024 = vperm.slane %v890, 7
    %v1025 = vperm.slane %v891, 7
    %v1026 = vmul.f32 %v1018, %v1024
    %v1027 = vmul.f32 %v1018, %v1025
    %v1028 = vmul.f32 %v1022, %v1024
    %v1029 = vmul.f32 %v1022, %v1025
    %v1030 = vadd.f32 %v1012, %v1026
    %v1031 = vadd.f32 %v1013, %v1027
    %v1032 = vadd.f32 %v1014, %v1028
    %v1033 = vadd.f32 %v1015, %v1029
    %1034 = vst [vmem:[%s9] sm:$0xff] %v1030
    %1035 = vst [vmem:[%s9 + $0x8] sm:$0xff] %v1031
    %1036 = vst [vmem:[%s9 + $0x10] sm:$0xff] %v1032
    %1037 = vst [vmem:[%s9 + $0x18] sm:$0xff] %v1033
    // Predicated region
    $region46: #{frequency_transform.1} parent=1 // pred_check
      _
    $region47: #{frequency_transform.1} parent=1 // pred_check_branch
      %1039 = sbr.rel (0) target = $region49
    $region48: #{frequency_transform.1} parent=1 // pred_region
      _
    $region49: #{frequency_transform.1} parent=1 // pred_fallthru
      _
    // Predicated region
    $region50: #{frequency_transform.1} parent=1 // pred_check
      _
    $region51: #{frequency_transform.1} parent=1 // pred_check_branch
      %1041 = sbr.rel (0) target = $region53
    $region52: #{frequency_transform.1} parent=1 // pred_region
      _
    $region53: #{frequency_transform.1} parent=1 // pred_fallthru
      _
    %1042 = vsyncpa [#allocation3], 1
    %1043 = vsyncpa [#allocation5], 1

</llo_original>
